<compile_context>
chip_gen: v7x
topology: tpu7x:2x2x1
jax: 0.10.0
libtpu: 0.0.40
codegen_flags: <defaults>
</compile_context>

<pallas_src>
import jax
import jax.numpy as jnp
from jax.experimental import pallas as pl
from jax.experimental.pallas import tpu as pltpu

# ---- model config (small, consistent with uav_encod of shape (1, 3, 16)) ----
EMBED_DIM = 16
NHEAD = 2
HEAD_DIM = EMBED_DIM // NHEAD
DIM_FF = 32
NLAYERS = 2
N_OOI = 5
N_UAV = 3
SEQ = N_OOI + N_UAV          # 8
BATCH = 2
LN_EPS = 1e-5
LANES = 128
NEG_INF = -1e30

# f32 everywhere for exactness; flip to jnp.bfloat16 on v6e/v7x for lower MXU
# latency + halved weight DMA (accumulation stays f32 via preferred_element_type).
MATMUL_DTYPE = jnp.float32


def _layer_norm(x, gamma, beta):
    mu = jnp.mean(x, axis=-1, keepdims=True)
    var = jnp.mean((x - mu) ** 2, axis=-1, keepdims=True)
    return (x - mu) * jax.lax.rsqrt(var + LN_EPS) * gamma + beta


def _mm(a, b):
    return jnp.dot(a.astype(MATMUL_DTYPE), b.astype(MATMUL_DTYPE),
                   preferred_element_type=jnp.float32)


def _mm_nt(a, b):  # a @ b.T  (contract last dim of both)
    return jax.lax.dot_general(a.astype(MATMUL_DTYPE), b.astype(MATMUL_DTYPE),
                               (((1,), (1,)), ((), ())),
                               preferred_element_type=jnp.float32)


# ---------------------------------------------------------------------------
# Parameter packing: lane-dense bands inside a single (rows, 128) f32 buffer.
# Every placement is a static python int, so in-kernel slices are free refs.
# ---------------------------------------------------------------------------
def _pad8(r):
    return ((r + 7) // 8) * 8


class _Packer:
    def __init__(self):
        self.rows = 0
        self.entries = {}   # name -> (r0, c0, r, c)
        self.values = {}

    def band(self, nrows):
        r0 = self.rows
        self.rows += _pad8(nrows)
        return r0

    def put(self, name, arr, r0, c0):
        arr = jnp.asarray(arr, jnp.float32)
        arr = arr.reshape(-1, arr.shape[-1])
        r, c = arr.shape
        assert r0 + r <= self.rows and c0 + c <= LANES, name
        self.entries[name] = (r0, c0, r, c)
        self.values[name] = arr

    def finalize(self):
        buf = jnp.zeros((self.rows, LANES), jnp.float32)
        for name, (r0, c0, r, c) in self.entries.items():
            buf = buf.at[r0:r0 + r, c0:c0 + c].set(self.values[name])
        return buf


def pack_params(params, batch):
    E, F, L = EMBED_DIM, DIM_FF, NLAYERS
    pk = _Packer()

    # --- band V (8 rows): all (1, .) vectors packed along lanes, one row per group
    rV = pk.band(8)
    pk.put('b_ooi', params['b_ooi'], rV + 0, 0)
    pk.put('b_uav', params['b_uav'], rV + 0, E)
    bhead = jnp.zeros((1, 8), jnp.float32)
    bhead = bhead.at[:, 0:4].set(params['bp']).at[:, 4:5].set(params['bv'])
    pk.put('bhead', bhead, rV + 0, 2 * E)
    for l in range(L):
        rb = rV + 1 + 2 * l          # bias row of layer l
        rn = rV + 2 + 2 * l          # layernorm row of layer l
        pk.put(f'bqkv{l}', params['bqkv'][l], rb, 0)            # lanes 0:48
        pk.put(f'bo{l}',   params['bo'][l],   rb, 3 * E)        # 48:64
        pk.put(f'b1{l}',   params['b1'][l],   rb, 4 * E)        # 64:96
        pk.put(f'b2{l}',   params['b2'][l],   rb, 4 * E + F)    # 96:112
        pk.put(f'g1{l}',   params['g1'][l],   rn, 0)
        pk.put(f'be1{l}',  params['be1'][l],  rn, E)
        pk.put(f'g2{l}',   params['g2'][l],   rn, 2 * E)
        pk.put(f'be2{l}',  params['be2'][l],  rn, 3 * E)

    # --- band S (8 rows): small input-projection weights
    rS = pk.band(8)
    pk.put('w_ooi', params['w_ooi'], rS, 0)        # (2, E)  lanes 0:16
    pk.put('w_uav', params['w_uav'], rS, E)        # (4, E)  lanes 16:32

    # --- band U: uav positional encoding, pre-tiled over batch (no in-kernel tile)
    rU = pk.band(batch * N_UAV)
    enc = jnp.tile(jnp.asarray(params['uav_enc'], jnp.float32).reshape(N_UAV, E),
                   (batch, 1))
    pk.put('uav_enc', enc, rU, 0)

    # --- band W16 (16 rows): fused wqkv (kept whole -> one MXU matmul) + wo
    rW = pk.band(E)
    for l in range(L):
        pk.put(f'wqkv{l}', params['wqkv'][l], rW, 3 * E * l)      # 0:48 / 48:96
        pk.put(f'wo{l}',   params['wo'][l],   rW, 6 * E + E * l)  # 96:112 / 112:128

    # --- band W16b (16 rows): ffn first matmul
    rW1 = pk.band(E)
    for l in range(L):
        pk.put(f'w1{l}', params['w1'][l], rW1, F * l)             # 0:32 / 32:64

    # --- band W32 (32 rows): ffn second matmul + fused predict/value head
    rW2 = pk.band(2 * E)
    for l in range(L):
        pk.put(f'w2{l}', params['w2'][l], rW2, E * l)             # 0:16 / 16:32
    whead = jnp.zeros((2 * E, 8), jnp.float32)
    whead = whead.at[:, 0:4].set(params['wp']).at[:, 4:5].set(params['wv'])
    pk.put('whead', whead, rW2, 2 * E)                            # 32:40

    return pk.finalize(), pk.entries


# ---------------------------------------------------------------------------
# Kernel
# ---------------------------------------------------------------------------
def _make_kernel(entries, B):
    E, Dh, H = EMBED_DIM, HEAD_DIM, NHEAD
    T = B * SEQ
    NO = B * N_OOI
    NU = B * N_UAV
    f32 = jnp.float32
    scale = 1.0 / (Dh ** 0.5)

    def get(p_ref, name):
        r0, c0, r, c = entries[name]
        return p_ref[r0:r0 + r, c0:c0 + c]

    def kernel(ooi_ref, uav_ref, mask_ref, p_ref, out_ref):
        # ---- input projections on the VPU (contraction depth 2 / 4) ----
        ooi = ooi_ref[...]                            # (NO, 2)
        w_ooi = get(p_ref, 'w_ooi')                   # (2, E)
        ooi_e = (get(p_ref, 'b_ooi')
                 + ooi[:, 0:1] * w_ooi[0:1, :]
                 + ooi[:, 1:2] * w_ooi[1:2, :])
        ooi_e = jax.nn.relu(ooi_e)                    # (NO, E)

        uav = uav_ref[...]                            # (NU, 4)
        w_uav = get(p_ref, 'w_uav')                   # (4, E)
        uav_e = get(p_ref, 'b_uav')
        for c in range(4):
            uav_e = uav_e + uav[:, c:c + 1] * w_uav[c:c + 1, :]
        uav_e = jax.nn.relu(uav_e) + get(p_ref, 'uav_enc')   # (NU, E), enc pre-tiled

        # token order: [ooi_b0.., ooi_b(B-1).., uav_b0.., uav_b(B-1)..]
        x = jnp.concatenate([ooi_e, uav_e], axis=0)          # (T, E)

        # ---- loop-invariant additive attention mask, built once ----
        # mask_ref: (1, NO); 1 -> valid ooi key, 0 -> padded key.  UAV keys
        # are never padded, so every softmax row stays finite.
        key_neg = jnp.concatenate(
            [(1.0 - mask_ref[...]) * NEG_INF, jnp.zeros((1, NU), f32)], axis=1)  # (1, T)

        def batch_id(tok):
            ooi_b = jnp.zeros_like(tok)
            uav_b = jnp.zeros_like(tok)
            for b in range(1, B):
                ooi_b = ooi_b + (tok >= b * N_OOI).astype(jnp.int32)
                uav_b = uav_b + (tok >= NO + b * N_UAV).astype(jnp.int32)
            return jnp.where(tok < NO, ooi_b, uav_b)

        r_idx = jax.lax.broadcasted_iota(jnp.int32, (H * T, T), 0)
        row_tok = r_idx
        for _ in range(H - 1):                        # fold head copies back to [0, T)
            row_tok = jnp.where(row_tok >= T, row_tok - T, row_tok)
        col_tok = jax.lax.broadcasted_iota(jnp.int32, (H * T, T), 1)
        mask = jnp.where(batch_id(row_tok) == batch_id(col_tok), 0.0, NEG_INF) + key_neg

        # head masks over the E lanes (head h = lanes [h*Dh, (h+1)*Dh))
        lane = jax.lax.broadcasted_iota(jnp.int32, (1, E), 1)
        hmasks = [((lane >= h * Dh) & (lane < (h + 1) * Dh)).astype(f32)
                  for h in range(H)]

        for l in range(NLAYERS):
            # fused QKV: one (T,E)x(E,3E) MXU matmul, q/k/v are lane slices
            qkv = _mm(x, get(p_ref, f'wqkv{l}')) + get(p_ref, f'bqkv{l}')   # (T, 3E)
            q = qkv[:, 0:E]
            k = qkv[:, E:2 * E]
            v = qkv[:, 2 * E:3 * E]

            # heads stacked along sublanes via head-masked Q: (H*T, E)
            q_hs = jnp.concatenate([q * m for m in hmasks], axis=0)

            # scores for all (head, batch, query) rows at once: (H*T, T)
            s = _mm_nt(q_hs, k) * scale + mask
            p = jnp.exp(s - jnp.max(s, axis=-1, keepdims=True))
            p = p * pl.reciprocal(jnp.sum(p, axis=-1, keepdims=True), approx=True)

            o = _mm(p, v)                                                    # (H*T, E)
            attn = o[0:T, :] * hmasks[0]
            for h in range(1, H):
                attn = attn + o[h * T:(h + 1) * T, :] * hmasks[h]            # (T, E)
            attn = _mm(attn, get(p_ref, f'wo{l}')) + get(p_ref, f'bo{l}')

            x = _layer_norm(x + attn, get(p_ref, f'g1{l}'), get(p_ref, f'be1{l}'))

            hdn = jax.nn.relu(_mm(x, get(p_ref, f'w1{l}')) + get(p_ref, f'b1{l}'))
            ff = _mm(hdn, get(p_ref, f'w2{l}')) + get(p_ref, f'b2{l}')
            x = _layer_norm(x + ff, get(p_ref, f'g2{l}'), get(p_ref, f'be2{l}'))

        # ---- fused predict/value heads on the last two (uav) tokens per batch ----
        rows = []
        for b in range(B):
            r0 = NO + b * N_UAV + (N_UAV - 2)
            rows.append(jnp.concatenate([x[r0:r0 + 1, :], x[r0 + 1:r0 + 2, :]], axis=1))
        flat = jnp.concatenate(rows, axis=0)                                 # (B, 2E)
        out_ref[...] = _mm(flat, get(p_ref, 'whead')) + get(p_ref, 'bhead')  # (B, 8)

    return kernel


def make_pallas_forward(entries, batch, n_param_rows):
    kernel = _make_kernel(entries, batch)
    T = batch * SEQ

    # advisory cost estimate (tiny kernel, latency bound)
    mm_macs = NLAYERS * (T * EMBED_DIM * 3 * EMBED_DIM
                         + 2 * (NHEAD * T) * T * EMBED_DIM
                         + T * EMBED_DIM * EMBED_DIM
                         + 2 * T * EMBED_DIM * DIM_FF)
    mm_macs += batch * 2 * EMBED_DIM * 8
    bytes_accessed = n_param_rows * LANES * 4 + 4 * batch * (
        N_OOI * 2 + N_UAV * 4 + N_OOI + 8)

    vmem = pl.BlockSpec(memory_space=pltpu.MemorySpace.VMEM)
    call = pl.pallas_call(
        kernel,
        out_shape=jax.ShapeDtypeStruct((batch, 8), jnp.float32),
        in_specs=[vmem, vmem, vmem, vmem],
        out_specs=vmem,
        compiler_params=pltpu.CompilerParams(vmem_limit_bytes=8 * 1024 * 1024),
        cost_estimate=pl.CostEstimate(
            flops=2 * mm_macs,
            transcendentals=NLAYERS * (NHEAD * T * T + NHEAD * T + 2 * T),
            bytes_accessed=bytes_accessed),
    )

    @jax.jit
    def fwd(ooi, ooi_mask, uav, packed):
        # contiguous reshapes only -> free metadata ops, no extra XLA kernels
        ooi2 = ooi.reshape(batch * N_OOI, 2)
        uav2 = uav.reshape(batch * N_UAV, 4)
        mask2 = ooi_mask.reshape(1, batch * N_OOI)
        fused = call(ooi2, uav2, mask2, packed)
        return fused[:, 0:4], fused[:, 4:5]

    return fwd


# ---------------------------------------------------------------------------
# Raw (unpacked) parameters + pure-JAX reference
# ---------------------------------------------------------------------------
def init_params(key):
    def u(k, shape, scale=0.2):
        return jax.random.uniform(k, shape, jnp.float32, -scale, scale)

    ks = iter(jax.random.split(key, 32))
    E, F, L = EMBED_DIM, DIM_FF, NLAYERS
    return {
        'w_ooi': u(next(ks), (2, E)),        'b_ooi': u(next(ks), (1, E)),
        'w_uav': u(next(ks), (4, E)),        'b_uav': u(next(ks), (1, E)),
        'uav_enc': jax.random.uniform(next(ks), (1, N_UAV, E), jnp.float32, -0.5, 0.5),
        'wqkv': u(next(ks), (L, E, 3 * E)),  'bqkv': u(next(ks), (L, 1, 3 * E)),
        'wo': u(next(ks), (L, E, E)),        'bo': u(next(ks), (L, 1, E)),
        'g1': jnp.ones((L, 1, E), jnp.float32),
        'be1': jnp.zeros((L, 1, E), jnp.float32),
        'w1': u(next(ks), (L, E, F)),        'b1': u(next(ks), (L, 1, F)),
        'w2': u(next(ks), (L, F, E)),        'b2': u(next(ks), (L, 1, E)),
        'g2': jnp.ones((L, 1, E), jnp.float32),
        'be2': jnp.zeros((L, 1, E), jnp.float32),
        'wp': u(next(ks), (2 * E, 4)),       'bp': u(next(ks), (1, 4)),
        'wv': u(next(ks), (2 * E, 1)),       'bv': u(next(ks), (1, 1)),
    }


def reference_forward(ooi, ooi_mask, uav, params):
    B = ooi.shape[0]
    E, H, Dh = EMBED_DIM, NHEAD, HEAD_DIM
    f32 = jnp.float32
    pad_mask = jnp.concatenate([1.0 - ooi_mask, jnp.zeros((B, N_UAV), f32)], axis=1)
    neg = pad_mask * NEG_INF

    ooi_e = jax.nn.relu(ooi.reshape(B * N_OOI, 2) @ params['w_ooi'] + params['b_ooi'])
    uav_e = jax.nn.relu(uav.reshape(B * N_UAV, 4) @ params['w_uav'] + params['b_uav'])
    ooi_e = ooi_e.reshape(B, N_OOI, E)
    uav_e = uav_e.reshape(B, N_UAV, E) + params['uav_enc']
    x = jnp.concatenate([ooi_e, uav_e], axis=1)

    scale = 1.0 / (Dh ** 0.5)
    for l in range(NLAYERS):
        x2 = x.reshape(B * SEQ, E)
        qkv = (x2 @ params['wqkv'][l] + params['bqkv'][l]).reshape(B, SEQ, 3 * E)
        q, k, v = qkv[..., :E], qkv[..., E:2 * E], qkv[..., 2 * E:]
        heads = []
        for h in range(H):
            qh = q[..., h * Dh:(h + 1) * Dh]
            kh = k[..., h * Dh:(h + 1) * Dh]
            vh = v[..., h * Dh:(h + 1) * Dh]
            s = jnp.einsum('bsd,btd->bst', qh, kh) * scale + neg[:, None, :]
            p = jax.nn.softmax(s, axis=-1)
            heads.append(jnp.einsum('bst,btd->bsd', p, vh))
        attn = jnp.concatenate(heads, axis=-1).reshape(B * SEQ, E)
        attn = attn @ params['wo'][l] + params['bo'][l]
        x2 = _layer_norm(x.reshape(B * SEQ, E) + attn, params['g1'][l], params['be1'][l])
        hdn = jax.nn.relu(x2 @ params['w1'][l] + params['b1'][l])
        ff = hdn @ params['w2'][l] + params['b2'][l]
        x2 = _layer_norm(x2 + ff, params['g2'][l], params['be2'][l])
        x = x2.reshape(B, SEQ, E)

    flat = jnp.concatenate([x[:, -2, :], x[:, -1, :]], axis=-1)
    out = flat @ params['wp'] + params['bp']
    val = flat @ params['wv'] + params['bv']
    return out, val


# TODO(synk): RLlib TorchModelV2 scaffolding (input_dict/state/seq_lens, the
# value_function() side channel) has no Pallas equivalent; only forward math
# is implemented.

if __name__ == "__main__":
    key = jax.random.PRNGKey(0)
    k_ooi, k_mask, k_uav, k_par = jax.random.split(key, 4)

    ooi = jax.random.normal(k_ooi, (BATCH, N_OOI, 2), jnp.float32)
    ooi_mask = jax.random.bernoulli(k_mask, 0.7, (BATCH, N_OOI)).astype(jnp.float32)
    uav = jax.random.normal(k_uav, (BATCH, N_UAV, 4), jnp.float32)
    params = init_params(k_par)

    packed, entries = pack_params(params, BATCH)
    fwd = make_pallas_forward(entries, BATCH, packed.shape[0])

    out, val = fwd(ooi, ooi_mask, uav, packed)
    out, val = jax.block_until_ready((out, val))

    out_ref, val_ref = reference_forward(ooi, ooi_mask, uav, params)
    assert out.shape == (BATCH, 4) and val.shape == (BATCH, 1)
    # 2e-3 tolerance: only deviation from the f32 reference is the EUP
    # approximate reciprocal in the softmax normalization.
    assert jnp.allclose(out, out_ref, atol=2e-3, rtol=2e-3)
    assert jnp.allclose(val, val_ref, atol=2e-3, rtol=2e-3)

    print("KERNEL_OK")
</pallas_src>

<mosaic_0001>
module attributes {stable_mosaic.version = 11 : i64} {
  func.func @kernel(%arg0: memref<10x2xf32, #tpu.memory_space<vmem>>, %arg1: memref<6x4xf32, #tpu.memory_space<vmem>>, %arg2: memref<1x10xf32, #tpu.memory_space<vmem>>, %arg3: memref<88x128xf32, #tpu.memory_space<vmem>>, %arg4: memref<2x8xf32, #tpu.memory_space<vmem>>) attributes {dimension_semantics = [], scalar_prefetch = 0 : i64, scratch_operands = 0 : i64, tpu.core_type = #tpu.core_type<tc>} {
    %c0 = arith.constant 0 : index
    %c0_0 = arith.constant 0 : index
    %0 = vector.load %arg0[%c0, %c0_0] : memref<10x2xf32, #tpu.memory_space<vmem>>, vector<10x2xf32>
    %c8 = arith.constant 8 : index
    %c0_1 = arith.constant 0 : index
    %1 = vector.load %arg3[%c8, %c0_1] : memref<88x128xf32, #tpu.memory_space<vmem>>, vector<2x16xf32>
    %c0_2 = arith.constant 0 : index
    %c0_3 = arith.constant 0 : index
    %2 = vector.load %arg3[%c0_2, %c0_3] : memref<88x128xf32, #tpu.memory_space<vmem>>, vector<1x16xf32>
    %3 = vector.extract_strided_slice %0 {offsets = [0, 0], sizes = [10, 1], strides = [1, 1]} : vector<10x2xf32> to vector<10x1xf32>
    %4 = vector.extract_strided_slice %1 {offsets = [0, 0], sizes = [1, 16], strides = [1, 1]} : vector<2x16xf32> to vector<1x16xf32>
    %5 = vector.broadcast %3 : vector<10x1xf32> to vector<10x16xf32>
    %6 = vector.broadcast %4 : vector<1x16xf32> to vector<10x16xf32>
    %7 = arith.mulf %5, %6 : vector<10x16xf32>
    %8 = vector.broadcast %2 : vector<1x16xf32> to vector<10x16xf32>
    %9 = arith.addf %8, %7 : vector<10x16xf32>
    %10 = vector.extract_strided_slice %0 {offsets = [0, 1], sizes = [10, 1], strides = [1, 1]} : vector<10x2xf32> to vector<10x1xf32>
    %11 = vector.extract_strided_slice %1 {offsets = [1, 0], sizes = [1, 16], strides = [1, 1]} : vector<2x16xf32> to vector<1x16xf32>
    %12 = vector.broadcast %10 : vector<10x1xf32> to vector<10x16xf32>
    %13 = vector.broadcast %11 : vector<1x16xf32> to vector<10x16xf32>
    %14 = arith.mulf %12, %13 : vector<10x16xf32>
    %15 = arith.addf %9, %14 : vector<10x16xf32>
    %cst = arith.constant 0.000000e+00 : f32
    %16 = vector.broadcast %cst : f32 to vector<10x16xf32>
    %17 = arith.maximumf %15, %16 : vector<10x16xf32>
    %c0_4 = arith.constant 0 : index
    %c0_5 = arith.constant 0 : index
    %18 = vector.load %arg1[%c0_4, %c0_5] : memref<6x4xf32, #tpu.memory_space<vmem>>, vector<6x4xf32>
    %c8_6 = arith.constant 8 : index
    %c16 = arith.constant 16 : index
    %19 = vector.load %arg3[%c8_6, %c16] : memref<88x128xf32, #tpu.memory_space<vmem>>, vector<4x16xf32>
    %c0_7 = arith.constant 0 : index
    %c16_8 = arith.constant 16 : index
    %20 = vector.load %arg3[%c0_7, %c16_8] : memref<88x128xf32, #tpu.memory_space<vmem>>, vector<1x16xf32>
    %21 = vector.extract_strided_slice %18 {offsets = [0, 0], sizes = [6, 1], strides = [1, 1]} : vector<6x4xf32> to vector<6x1xf32>
    %22 = vector.extract_strided_slice %19 {offsets = [0, 0], sizes = [1, 16], strides = [1, 1]} : vector<4x16xf32> to vector<1x16xf32>
    %23 = vector.broadcast %21 : vector<6x1xf32> to vector<6x16xf32>
    %24 = vector.broadcast %22 : vector<1x16xf32> to vector<6x16xf32>
    %25 = arith.mulf %23, %24 : vector<6x16xf32>
    %26 = vector.broadcast %20 : vector<1x16xf32> to vector<6x16xf32>
    %27 = arith.addf %26, %25 : vector<6x16xf32>
    %28 = vector.extract_strided_slice %18 {offsets = [0, 1], sizes = [6, 1], strides = [1, 1]} : vector<6x4xf32> to vector<6x1xf32>
    %29 = vector.extract_strided_slice %19 {offsets = [1, 0], sizes = [1, 16], strides = [1, 1]} : vector<4x16xf32> to vector<1x16xf32>
    %30 = vector.broadcast %28 : vector<6x1xf32> to vector<6x16xf32>
    %31 = vector.broadcast %29 : vector<1x16xf32> to vector<6x16xf32>
    %32 = arith.mulf %30, %31 : vector<6x16xf32>
    %33 = arith.addf %27, %32 : vector<6x16xf32>
    %34 = vector.extract_strided_slice %18 {offsets = [0, 2], sizes = [6, 1], strides = [1, 1]} : vector<6x4xf32> to vector<6x1xf32>
    %35 = vector.extract_strided_slice %19 {offsets = [2, 0], sizes = [1, 16], strides = [1, 1]} : vector<4x16xf32> to vector<1x16xf32>
    %36 = vector.broadcast %34 : vector<6x1xf32> to vector<6x16xf32>
    %37 = vector.broadcast %35 : vector<1x16xf32> to vector<6x16xf32>
    %38 = arith.mulf %36, %37 : vector<6x16xf32>
    %39 = arith.addf %33, %38 : vector<6x16xf32>
    %40 = vector.extract_strided_slice %18 {offsets = [0, 3], sizes = [6, 1], strides = [1, 1]} : vector<6x4xf32> to vector<6x1xf32>
    %41 = vector.extract_strided_slice %19 {offsets = [3, 0], sizes = [1, 16], strides = [1, 1]} : vector<4x16xf32> to vector<1x16xf32>
    %42 = vector.broadcast %40 : vector<6x1xf32> to vector<6x16xf32>
    %43 = vector.broadcast %41 : vector<1x16xf32> to vector<6x16xf32>
    %44 = arith.mulf %42, %43 : vector<6x16xf32>
    %45 = arith.addf %39, %44 : vector<6x16xf32>
    %cst_9 = arith.constant 0.000000e+00 : f32
    %46 = vector.broadcast %cst_9 : f32 to vector<6x16xf32>
    %47 = arith.maximumf %45, %46 : vector<6x16xf32>
    %c16_10 = arith.constant 16 : index
    %c0_11 = arith.constant 0 : index
    %48 = vector.load %arg3[%c16_10, %c0_11] : memref<88x128xf32, #tpu.memory_space<vmem>>, vector<6x16xf32>
    %49 = arith.addf %47, %48 : vector<6x16xf32>
    %50 = tpu.concatenate %17, %49 in 0 : vector<10x16xf32>, vector<6x16xf32> -> vector<16x16xf32>
    %c0_12 = arith.constant 0 : index
    %c0_13 = arith.constant 0 : index
    %51 = vector.load %arg2[%c0_12, %c0_13] : memref<1x10xf32, #tpu.memory_space<vmem>>, vector<1x10xf32>
    %cst_14 = arith.constant 1.000000e+00 : f32
    %52 = vector.broadcast %cst_14 : f32 to vector<1x10xf32>
    %53 = arith.subf %52, %51 : vector<1x10xf32>
    %cst_15 = arith.constant -1.000000e+30 : f32
    %54 = vector.broadcast %cst_15 : f32 to vector<1x10xf32>
    %55 = arith.mulf %53, %54 : vector<1x10xf32>
    %cst_16 = arith.constant 0.000000e+00 : f32
    %56 = vector.broadcast %cst_16 : f32 to vector<1x6xf32>
    %57 = tpu.concatenate %55, %56 in 1 : vector<1x10xf32>, vector<1x6xf32> -> vector<1x16xf32>
    %58 = tpu.iota {dimensions = array<i32: 0>} : vector<32x16xi32>
    %c16_i32 = arith.constant 16 : i32
    %59 = vector.broadcast %c16_i32 : i32 to vector<32x16xi32>
    %60 = arith.cmpi sge, %58, %59 : vector<32x16xi32>
    %c16_i32_17 = arith.constant 16 : i32
    %61 = vector.broadcast %c16_i32_17 : i32 to vector<32x16xi32>
    %62 = arith.subi %58, %61 : vector<32x16xi32>
    %63 = arith.select %60, %62, %58 : vector<32x16xi1>, vector<32x16xi32>
    %64 = tpu.iota {dimensions = array<i32: 1>} : vector<32x16xi32>
    %c0_i32 = arith.constant 0 : i32
    %65 = vector.broadcast %c0_i32 : i32 to vector<32x16xi32>
    %c0_i32_18 = arith.constant 0 : i32
    %66 = vector.broadcast %c0_i32_18 : i32 to vector<32x16xi32>
    %c5_i32 = arith.constant 5 : i32
    %67 = vector.broadcast %c5_i32 : i32 to vector<32x16xi32>
    %68 = arith.cmpi sge, %63, %67 : vector<32x16xi32>
    %69 = arith.extui %68 : vector<32x16xi1> to vector<32x16xi32>
    %70 = arith.addi %65, %69 : vector<32x16xi32>
    %c13_i32 = arith.constant 13 : i32
    %71 = vector.broadcast %c13_i32 : i32 to vector<32x16xi32>
    %72 = arith.cmpi sge, %63, %71 : vector<32x16xi32>
    %73 = arith.extui %72 : vector<32x16xi1> to vector<32x16xi32>
    %74 = arith.addi %66, %73 : vector<32x16xi32>
    %c10_i32 = arith.constant 10 : i32
    %75 = vector.broadcast %c10_i32 : i32 to vector<32x16xi32>
    %76 = arith.cmpi slt, %63, %75 : vector<32x16xi32>
    %77 = arith.select %76, %70, %74 : vector<32x16xi1>, vector<32x16xi32>
    %c0_i32_19 = arith.constant 0 : i32
    %78 = vector.broadcast %c0_i32_19 : i32 to vector<32x16xi32>
    %c0_i32_20 = arith.constant 0 : i32
    %79 = vector.broadcast %c0_i32_20 : i32 to vector<32x16xi32>
    %c5_i32_21 = arith.constant 5 : i32
    %80 = vector.broadcast %c5_i32_21 : i32 to vector<32x16xi32>
    %81 = arith.cmpi sge, %64, %80 : vector<32x16xi32>
    %82 = arith.extui %81 : vector<32x16xi1> to vector<32x16xi32>
    %83 = arith.addi %78, %82 : vector<32x16xi32>
    %c13_i32_22 = arith.constant 13 : i32
    %84 = vector.broadcast %c13_i32_22 : i32 to vector<32x16xi32>
    %85 = arith.cmpi sge, %64, %84 : vector<32x16xi32>
    %86 = arith.extui %85 : vector<32x16xi1> to vector<32x16xi32>
    %87 = arith.addi %79, %86 : vector<32x16xi32>
    %c10_i32_23 = arith.constant 10 : i32
    %88 = vector.broadcast %c10_i32_23 : i32 to vector<32x16xi32>
    %89 = arith.cmpi slt, %64, %88 : vector<32x16xi32>
    %90 = arith.select %89, %83, %87 : vector<32x16xi1>, vector<32x16xi32>
    %91 = arith.cmpi eq, %77, %90 : vector<32x16xi32>
    %cst_24 = arith.constant 0.000000e+00 : f32
    %cst_25 = arith.constant -1.000000e+30 : f32
    %92 = vector.broadcast %cst_24 : f32 to vector<32x16xf32>
    %93 = vector.broadcast %cst_25 : f32 to vector<32x16xf32>
    %94 = arith.select %91, %92, %93 : vector<32x16xi1>, vector<32x16xf32>
    %95 = vector.broadcast %57 : vector<1x16xf32> to vector<32x16xf32>
    %96 = arith.addf %94, %95 : vector<32x16xf32>
    %97 = tpu.iota {dimensions = array<i32: 1>} : vector<1x16xi32>
    %c0_i32_26 = arith.constant 0 : i32
    %98 = vector.broadcast %c0_i32_26 : i32 to vector<1x16xi32>
    %99 = arith.cmpi sge, %97, %98 : vector<1x16xi32>
    %c8_i32 = arith.constant 8 : i32
    %100 = vector.broadcast %c8_i32 : i32 to vector<1x16xi32>
    %101 = arith.cmpi slt, %97, %100 : vector<1x16xi32>
    %102 = arith.andi %99, %101 : vector<1x16xi1>
    %103 = arith.extui %102 : vector<1x16xi1> to vector<1x16xi32>
    %104 = arith.sitofp %103 : vector<1x16xi32> to vector<1x16xf32>
    %c8_i32_27 = arith.constant 8 : i32
    %105 = vector.broadcast %c8_i32_27 : i32 to vector<1x16xi32>
    %106 = arith.cmpi sge, %97, %105 : vector<1x16xi32>
    %c16_i32_28 = arith.constant 16 : i32
    %107 = vector.broadcast %c16_i32_28 : i32 to vector<1x16xi32>
    %108 = arith.cmpi slt, %97, %107 : vector<1x16xi32>
    %109 = arith.andi %106, %108 : vector<1x16xi1>
    %110 = arith.extui %109 : vector<1x16xi1> to vector<1x16xi32>
    %111 = arith.sitofp %110 : vector<1x16xi32> to vector<1x16xf32>
    %c24 = arith.constant 24 : index
    %c0_29 = arith.constant 0 : index
    %112 = vector.load %arg3[%c24, %c0_29] : memref<88x128xf32, #tpu.memory_space<vmem>>, vector<16x48xf32>
    %cst_30 = arith.constant dense<0.000000e+00> : vector<16x48xf32>
    %113 = tpu.matmul %50, %112, %cst_30 {dimension_numbers = #tpu.dot_dimension_numbers<[1], [0], [0], [1], [0, 0, 1, 1], [], []>} : vector<16x16xf32>, vector<16x48xf32>, vector<16x48xf32> -> vector<16x48xf32>
    %c1 = arith.constant 1 : index
    %c0_31 = arith.constant 0 : index
    %114 = vector.load %arg3[%c1, %c0_31] : memref<88x128xf32, #tpu.memory_space<vmem>>, vector<1x48xf32>
    %115 = vector.broadcast %114 : vector<1x48xf32> to vector<16x48xf32>
    %116 = arith.addf %113, %115 : vector<16x48xf32>
    %117 = vector.extract_strided_slice %116 {offsets = [0, 0], sizes = [16, 16], strides = [1, 1]} : vector<16x48xf32> to vector<16x16xf32>
    %118 = vector.extract_strided_slice %116 {offsets = [0, 16], sizes = [16, 16], strides = [1, 1]} : vector<16x48xf32> to vector<16x16xf32>
    %119 = vector.extract_strided_slice %116 {offsets = [0, 32], sizes = [16, 16], strides = [1, 1]} : vector<16x48xf32> to vector<16x16xf32>
    %120 = vector.broadcast %104 : vector<1x16xf32> to vector<16x16xf32>
    %121 = arith.mulf %117, %120 : vector<16x16xf32>
    %122 = vector.broadcast %111 : vector<1x16xf32> to vector<16x16xf32>
    %123 = arith.mulf %117, %122 : vector<16x16xf32>
    %124 = tpu.concatenate %121, %123 in 0 : vector<16x16xf32>, vector<16x16xf32> -> vector<32x16xf32>
    %cst_32 = arith.constant dense<0.000000e+00> : vector<32x16xf32>
    %125 = tpu.matmul %124, %118, %cst_32 {dimension_numbers = #tpu.dot_dimension_numbers<[1], [1], [0], [0], [0, 0, 1, 0], [], []>} : vector<32x16xf32>, vector<16x16xf32>, vector<32x16xf32> -> vector<32x16xf32>
    %cst_33 = arith.constant 0.353553385 : f32
    %126 = vector.broadcast %cst_33 : f32 to vector<32x16xf32>
    %127 = arith.mulf %125, %126 : vector<32x16xf32>
    %128 = arith.addf %127, %96 : vector<32x16xf32>
    %cst_34 = arith.constant dense<0xFF800000> : vector<32xf32>
    %129 = vector.multi_reduction <maximumf>, %128, %cst_34 [1] : vector<32x16xf32> to vector<32xf32>
    %130 = vector.shape_cast %129 : vector<32xf32> to vector<32x1xf32>
    %131 = vector.broadcast %130 : vector<32x1xf32> to vector<32x16xf32>
    %132 = arith.subf %128, %131 : vector<32x16xf32>
    %133 = math.exp %132 : vector<32x16xf32>
    %cst_35 = arith.constant dense<0.000000e+00> : vector<32xf32>
    %134 = vector.multi_reduction <add>, %133, %cst_35 [1] : vector<32x16xf32> to vector<32xf32>
    %135 = vector.shape_cast %134 : vector<32xf32> to vector<32x1xf32>
    %136 = tpu.reciprocal %135 {approx = true} : vector<32x1xf32> -> vector<32x1xf32>
    %137 = vector.broadcast %136 : vector<32x1xf32> to vector<32x16xf32>
    %138 = arith.mulf %133, %137 : vector<32x16xf32>
    %cst_36 = arith.constant dense<0.000000e+00> : vector<32x16xf32>
    %139 = tpu.matmul %138, %119, %cst_36 {dimension_numbers = #tpu.dot_dimension_numbers<[1], [0], [0], [1], [0, 0, 1, 1], [], []>} : vector<32x16xf32>, vector<16x16xf32>, vector<32x16xf32> -> vector<32x16xf32>
    %140 = vector.extract_strided_slice %139 {offsets = [0, 0], sizes = [16, 16], strides = [1, 1]} : vector<32x16xf32> to vector<16x16xf32>
    %141 = vector.broadcast %104 : vector<1x16xf32> to vector<16x16xf32>
    %142 = arith.mulf %140, %141 : vector<16x16xf32>
    %143 = vector.extract_strided_slice %139 {offsets = [16, 0], sizes = [16, 16], strides = [1, 1]} : vector<32x16xf32> to vector<16x16xf32>
    %144 = vector.broadcast %111 : vector<1x16xf32> to vector<16x16xf32>
    %145 = arith.mulf %143, %144 : vector<16x16xf32>
    %146 = arith.addf %142, %145 : vector<16x16xf32>
    %c24_37 = arith.constant 24 : index
    %c96 = arith.constant 96 : index
    %147 = vector.load %arg3[%c24_37, %c96] : memref<88x128xf32, #tpu.memory_space<vmem>>, vector<16x16xf32>
    %cst_38 = arith.constant dense<0.000000e+00> : vector<16x16xf32>
    %148 = tpu.matmul %146, %147, %cst_38 {dimension_numbers = #tpu.dot_dimension_numbers<[1], [0], [0], [1], [0, 0, 1, 1], [], []>} : vector<16x16xf32>, vector<16x16xf32>, vector<16x16xf32> -> vector<16x16xf32>
    %c1_39 = arith.constant 1 : index
    %c48 = arith.constant 48 : index
    %149 = vector.load %arg3[%c1_39, %c48] : memref<88x128xf32, #tpu.memory_space<vmem>>, vector<1x16xf32>
    %150 = vector.broadcast %149 : vector<1x16xf32> to vector<16x16xf32>
    %151 = arith.addf %148, %150 : vector<16x16xf32>
    %152 = arith.addf %50, %151 : vector<16x16xf32>
    %c2 = arith.constant 2 : index
    %c0_40 = arith.constant 0 : index
    %153 = vector.load %arg3[%c2, %c0_40] : memref<88x128xf32, #tpu.memory_space<vmem>>, vector<1x16xf32>
    %c2_41 = arith.constant 2 : index
    %c16_42 = arith.constant 16 : index
    %154 = vector.load %arg3[%c2_41, %c16_42] : memref<88x128xf32, #tpu.memory_space<vmem>>, vector<1x16xf32>
    %cst_43 = arith.constant dense<0.000000e+00> : vector<16xf32>
    %155 = vector.multi_reduction <add>, %152, %cst_43 [1] : vector<16x16xf32> to vector<16xf32>
    %156 = vector.shape_cast %155 : vector<16xf32> to vector<16x1xf32>
    %cst_44 = arith.constant 1.600000e+01 : f32
    %157 = vector.broadcast %cst_44 : f32 to vector<16x1xf32>
    %158 = arith.divf %156, %157 : vector<16x1xf32>
    %159 = vector.broadcast %158 : vector<16x1xf32> to vector<16x16xf32>
    %160 = arith.subf %152, %159 : vector<16x16xf32>
    %161 = arith.mulf %160, %160 : vector<16x16xf32>
    %cst_45 = arith.constant dense<0.000000e+00> : vector<16xf32>
    %162 = vector.multi_reduction <add>, %161, %cst_45 [1] : vector<16x16xf32> to vector<16xf32>
    %163 = vector.shape_cast %162 : vector<16xf32> to vector<16x1xf32>
    %cst_46 = arith.constant 1.600000e+01 : f32
    %164 = vector.broadcast %cst_46 : f32 to vector<16x1xf32>
    %165 = arith.divf %163, %164 : vector<16x1xf32>
    %166 = vector.broadcast %158 : vector<16x1xf32> to vector<16x16xf32>
    %167 = arith.subf %152, %166 : vector<16x16xf32>
    %cst_47 = arith.constant 9.99999974E-6 : f32
    %168 = vector.broadcast %cst_47 : f32 to vector<16x1xf32>
    %169 = arith.addf %165, %168 : vector<16x1xf32>
    %170 = math.rsqrt %169 : vector<16x1xf32>
    %171 = vector.broadcast %170 : vector<16x1xf32> to vector<16x16xf32>
    %172 = arith.mulf %167, %171 : vector<16x16xf32>
    %173 = vector.broadcast %153 : vector<1x16xf32> to vector<16x16xf32>
    %174 = arith.mulf %172, %173 : vector<16x16xf32>
    %175 = vector.broadcast %154 : vector<1x16xf32> to vector<16x16xf32>
    %176 = arith.addf %174, %175 : vector<16x16xf32>
    %c40 = arith.constant 40 : index
    %c0_48 = arith.constant 0 : index
    %177 = vector.load %arg3[%c40, %c0_48] : memref<88x128xf32, #tpu.memory_space<vmem>>, vector<16x32xf32>
    %cst_49 = arith.constant dense<0.000000e+00> : vector<16x32xf32>
    %178 = tpu.matmul %176, %177, %cst_49 {dimension_numbers = #tpu.dot_dimension_numbers<[1], [0], [0], [1], [0, 0, 1, 1], [], []>} : vector<16x16xf32>, vector<16x32xf32>, vector<16x32xf32> -> vector<16x32xf32>
    %c1_50 = arith.constant 1 : index
    %c64 = arith.constant 64 : index
    %179 = vector.load %arg3[%c1_50, %c64] : memref<88x128xf32, #tpu.memory_space<vmem>>, vector<1x32xf32>
    %180 = vector.broadcast %179 : vector<1x32xf32> to vector<16x32xf32>
    %181 = arith.addf %178, %180 : vector<16x32xf32>
    %cst_51 = arith.constant 0.000000e+00 : f32
    %182 = vector.broadcast %cst_51 : f32 to vector<16x32xf32>
    %183 = arith.maximumf %181, %182 : vector<16x32xf32>
    %c56 = arith.constant 56 : index
    %c0_52 = arith.constant 0 : index
    %184 = vector.load %arg3[%c56, %c0_52] : memref<88x128xf32, #tpu.memory_space<vmem>>, vector<32x16xf32>
    %cst_53 = arith.constant dense<0.000000e+00> : vector<16x16xf32>
    %185 = tpu.matmul %183, %184, %cst_53 {dimension_numbers = #tpu.dot_dimension_numbers<[1], [0], [0], [1], [0, 0, 1, 1], [], []>} : vector<16x32xf32>, vector<32x16xf32>, vector<16x16xf32> -> vector<16x16xf32>
    %c1_54 = arith.constant 1 : index
    %c96_55 = arith.constant 96 : index
    %186 = vector.load %arg3[%c1_54, %c96_55] : memref<88x128xf32, #tpu.memory_space<vmem>>, vector<1x16xf32>
    %187 = vector.broadcast %186 : vector<1x16xf32> to vector<16x16xf32>
    %188 = arith.addf %185, %187 : vector<16x16xf32>
    %189 = arith.addf %176, %188 : vector<16x16xf32>
    %c2_56 = arith.constant 2 : index
    %c32 = arith.constant 32 : index
    %190 = vector.load %arg3[%c2_56, %c32] : memref<88x128xf32, #tpu.memory_space<vmem>>, vector<1x16xf32>
    %c2_57 = arith.constant 2 : index
    %c48_58 = arith.constant 48 : index
    %191 = vector.load %arg3[%c2_57, %c48_58] : memref<88x128xf32, #tpu.memory_space<vmem>>, vector<1x16xf32>
    %cst_59 = arith.constant dense<0.000000e+00> : vector<16xf32>
    %192 = vector.multi_reduction <add>, %189, %cst_59 [1] : vector<16x16xf32> to vector<16xf32>
    %193 = vector.shape_cast %192 : vector<16xf32> to vector<16x1xf32>
    %cst_60 = arith.constant 1.600000e+01 : f32
    %194 = vector.broadcast %cst_60 : f32 to vector<16x1xf32>
    %195 = arith.divf %193, %194 : vector<16x1xf32>
    %196 = vector.broadcast %195 : vector<16x1xf32> to vector<16x16xf32>
    %197 = arith.subf %189, %196 : vector<16x16xf32>
    %198 = arith.mulf %197, %197 : vector<16x16xf32>
    %cst_61 = arith.constant dense<0.000000e+00> : vector<16xf32>
    %199 = vector.multi_reduction <add>, %198, %cst_61 [1] : vector<16x16xf32> to vector<16xf32>
    %200 = vector.shape_cast %199 : vector<16xf32> to vector<16x1xf32>
    %cst_62 = arith.constant 1.600000e+01 : f32
    %201 = vector.broadcast %cst_62 : f32 to vector<16x1xf32>
    %202 = arith.divf %200, %201 : vector<16x1xf32>
    %203 = vector.broadcast %195 : vector<16x1xf32> to vector<16x16xf32>
    %204 = arith.subf %189, %203 : vector<16x16xf32>
    %cst_63 = arith.constant 9.99999974E-6 : f32
    %205 = vector.broadcast %cst_63 : f32 to vector<16x1xf32>
    %206 = arith.addf %202, %205 : vector<16x1xf32>
    %207 = math.rsqrt %206 : vector<16x1xf32>
    %208 = vector.broadcast %207 : vector<16x1xf32> to vector<16x16xf32>
    %209 = arith.mulf %204, %208 : vector<16x16xf32>
    %210 = vector.broadcast %190 : vector<1x16xf32> to vector<16x16xf32>
    %211 = arith.mulf %209, %210 : vector<16x16xf32>
    %212 = vector.broadcast %191 : vector<1x16xf32> to vector<16x16xf32>
    %213 = arith.addf %211, %212 : vector<16x16xf32>
    %c24_64 = arith.constant 24 : index
    %c48_65 = arith.constant 48 : index
    %214 = vector.load %arg3[%c24_64, %c48_65] : memref<88x128xf32, #tpu.memory_space<vmem>>, vector<16x48xf32>
    %cst_66 = arith.constant dense<0.000000e+00> : vector<16x48xf32>
    %215 = tpu.matmul %213, %214, %cst_66 {dimension_numbers = #tpu.dot_dimension_numbers<[1], [0], [0], [1], [0, 0, 1, 1], [], []>} : vector<16x16xf32>, vector<16x48xf32>, vector<16x48xf32> -> vector<16x48xf32>
    %c3 = arith.constant 3 : index
    %c0_67 = arith.constant 0 : index
    %216 = vector.load %arg3[%c3, %c0_67] : memref<88x128xf32, #tpu.memory_space<vmem>>, vector<1x48xf32>
    %217 = vector.broadcast %216 : vector<1x48xf32> to vector<16x48xf32>
    %218 = arith.addf %215, %217 : vector<16x48xf32>
    %219 = vector.extract_strided_slice %218 {offsets = [0, 0], sizes = [16, 16], strides = [1, 1]} : vector<16x48xf32> to vector<16x16xf32>
    %220 = vector.extract_strided_slice %218 {offsets = [0, 16], sizes = [16, 16], strides = [1, 1]} : vector<16x48xf32> to vector<16x16xf32>
    %221 = vector.extract_strided_slice %218 {offsets = [0, 32], sizes = [16, 16], strides = [1, 1]} : vector<16x48xf32> to vector<16x16xf32>
    %222 = vector.broadcast %104 : vector<1x16xf32> to vector<16x16xf32>
    %223 = arith.mulf %219, %222 : vector<16x16xf32>
    %224 = vector.broadcast %111 : vector<1x16xf32> to vector<16x16xf32>
    %225 = arith.mulf %219, %224 : vector<16x16xf32>
    %226 = tpu.concatenate %223, %225 in 0 : vector<16x16xf32>, vector<16x16xf32> -> vector<32x16xf32>
    %cst_68 = arith.constant dense<0.000000e+00> : vector<32x16xf32>
    %227 = tpu.matmul %226, %220, %cst_68 {dimension_numbers = #tpu.dot_dimension_numbers<[1], [1], [0], [0], [0, 0, 1, 0], [], []>} : vector<32x16xf32>, vector<16x16xf32>, vector<32x16xf32> -> vector<32x16xf32>
    %cst_69 = arith.constant 0.353553385 : f32
    %228 = vector.broadcast %cst_69 : f32 to vector<32x16xf32>
    %229 = arith.mulf %227, %228 : vector<32x16xf32>
    %230 = arith.addf %229, %96 : vector<32x16xf32>
    %cst_70 = arith.constant dense<0xFF800000> : vector<32xf32>
    %231 = vector.multi_reduction <maximumf>, %230, %cst_70 [1] : vector<32x16xf32> to vector<32xf32>
    %232 = vector.shape_cast %231 : vector<32xf32> to vector<32x1xf32>
    %233 = vector.broadcast %232 : vector<32x1xf32> to vector<32x16xf32>
    %234 = arith.subf %230, %233 : vector<32x16xf32>
    %235 = math.exp %234 : vector<32x16xf32>
    %cst_71 = arith.constant dense<0.000000e+00> : vector<32xf32>
    %236 = vector.multi_reduction <add>, %235, %cst_71 [1] : vector<32x16xf32> to vector<32xf32>
    %237 = vector.shape_cast %236 : vector<32xf32> to vector<32x1xf32>
    %238 = tpu.reciprocal %237 {approx = true} : vector<32x1xf32> -> vector<32x1xf32>
    %239 = vector.broadcast %238 : vector<32x1xf32> to vector<32x16xf32>
    %240 = arith.mulf %235, %239 : vector<32x16xf32>
    %cst_72 = arith.constant dense<0.000000e+00> : vector<32x16xf32>
    %241 = tpu.matmul %240, %221, %cst_72 {dimension_numbers = #tpu.dot_dimension_numbers<[1], [0], [0], [1], [0, 0, 1, 1], [], []>} : vector<32x16xf32>, vector<16x16xf32>, vector<32x16xf32> -> vector<32x16xf32>
    %242 = vector.extract_strided_slice %241 {offsets = [0, 0], sizes = [16, 16], strides = [1, 1]} : vector<32x16xf32> to vector<16x16xf32>
    %243 = vector.broadcast %104 : vector<1x16xf32> to vector<16x16xf32>
    %244 = arith.mulf %242, %243 : vector<16x16xf32>
    %245 = vector.extract_strided_slice %241 {offsets = [16, 0], sizes = [16, 16], strides = [1, 1]} : vector<32x16xf32> to vector<16x16xf32>
    %246 = vector.broadcast %111 : vector<1x16xf32> to vector<16x16xf32>
    %247 = arith.mulf %245, %246 : vector<16x16xf32>
    %248 = arith.addf %244, %247 : vector<16x16xf32>
    %c24_73 = arith.constant 24 : index
    %c112 = arith.constant 112 : index
    %249 = vector.load %arg3[%c24_73, %c112] : memref<88x128xf32, #tpu.memory_space<vmem>>, vector<16x16xf32>
    %cst_74 = arith.constant dense<0.000000e+00> : vector<16x16xf32>
    %250 = tpu.matmul %248, %249, %cst_74 {dimension_numbers = #tpu.dot_dimension_numbers<[1], [0], [0], [1], [0, 0, 1, 1], [], []>} : vector<16x16xf32>, vector<16x16xf32>, vector<16x16xf32> -> vector<16x16xf32>
    %c3_75 = arith.constant 3 : index
    %c48_76 = arith.constant 48 : index
    %251 = vector.load %arg3[%c3_75, %c48_76] : memref<88x128xf32, #tpu.memory_space<vmem>>, vector<1x16xf32>
    %252 = vector.broadcast %251 : vector<1x16xf32> to vector<16x16xf32>
    %253 = arith.addf %250, %252 : vector<16x16xf32>
    %254 = arith.addf %213, %253 : vector<16x16xf32>
    %c4 = arith.constant 4 : index
    %c0_77 = arith.constant 0 : index
    %255 = vector.load %arg3[%c4, %c0_77] : memref<88x128xf32, #tpu.memory_space<vmem>>, vector<1x16xf32>
    %c4_78 = arith.constant 4 : index
    %c16_79 = arith.constant 16 : index
    %256 = vector.load %arg3[%c4_78, %c16_79] : memref<88x128xf32, #tpu.memory_space<vmem>>, vector<1x16xf32>
    %cst_80 = arith.constant dense<0.000000e+00> : vector<16xf32>
    %257 = vector.multi_reduction <add>, %254, %cst_80 [1] : vector<16x16xf32> to vector<16xf32>
    %258 = vector.shape_cast %257 : vector<16xf32> to vector<16x1xf32>
    %cst_81 = arith.constant 1.600000e+01 : f32
    %259 = vector.broadcast %cst_81 : f32 to vector<16x1xf32>
    %260 = arith.divf %258, %259 : vector<16x1xf32>
    %261 = vector.broadcast %260 : vector<16x1xf32> to vector<16x16xf32>
    %262 = arith.subf %254, %261 : vector<16x16xf32>
    %263 = arith.mulf %262, %262 : vector<16x16xf32>
    %cst_82 = arith.constant dense<0.000000e+00> : vector<16xf32>
    %264 = vector.multi_reduction <add>, %263, %cst_82 [1] : vector<16x16xf32> to vector<16xf32>
    %265 = vector.shape_cast %264 : vector<16xf32> to vector<16x1xf32>
    %cst_83 = arith.constant 1.600000e+01 : f32
    %266 = vector.broadcast %cst_83 : f32 to vector<16x1xf32>
    %267 = arith.divf %265, %266 : vector<16x1xf32>
    %268 = vector.broadcast %260 : vector<16x1xf32> to vector<16x16xf32>
    %269 = arith.subf %254, %268 : vector<16x16xf32>
    %cst_84 = arith.constant 9.99999974E-6 : f32
    %270 = vector.broadcast %cst_84 : f32 to vector<16x1xf32>
    %271 = arith.addf %267, %270 : vector<16x1xf32>
    %272 = math.rsqrt %271 : vector<16x1xf32>
    %273 = vector.broadcast %272 : vector<16x1xf32> to vector<16x16xf32>
    %274 = arith.mulf %269, %273 : vector<16x16xf32>
    %275 = vector.broadcast %255 : vector<1x16xf32> to vector<16x16xf32>
    %276 = arith.mulf %274, %275 : vector<16x16xf32>
    %277 = vector.broadcast %256 : vector<1x16xf32> to vector<16x16xf32>
    %278 = arith.addf %276, %277 : vector<16x16xf32>
    %c40_85 = arith.constant 40 : index
    %c32_86 = arith.constant 32 : index
    %279 = vector.load %arg3[%c40_85, %c32_86] : memref<88x128xf32, #tpu.memory_space<vmem>>, vector<16x32xf32>
    %cst_87 = arith.constant dense<0.000000e+00> : vector<16x32xf32>
    %280 = tpu.matmul %278, %279, %cst_87 {dimension_numbers = #tpu.dot_dimension_numbers<[1], [0], [0], [1], [0, 0, 1, 1], [], []>} : vector<16x16xf32>, vector<16x32xf32>, vector<16x32xf32> -> vector<16x32xf32>
    %c3_88 = arith.constant 3 : index
    %c64_89 = arith.constant 64 : index
    %281 = vector.load %arg3[%c3_88, %c64_89] : memref<88x128xf32, #tpu.memory_space<vmem>>, vector<1x32xf32>
    %282 = vector.broadcast %281 : vector<1x32xf32> to vector<16x32xf32>
    %283 = arith.addf %280, %282 : vector<16x32xf32>
    %cst_90 = arith.constant 0.000000e+00 : f32
    %284 = vector.broadcast %cst_90 : f32 to vector<16x32xf32>
    %285 = arith.maximumf %283, %284 : vector<16x32xf32>
    %c56_91 = arith.constant 56 : index
    %c16_92 = arith.constant 16 : index
    %286 = vector.load %arg3[%c56_91, %c16_92] : memref<88x128xf32, #tpu.memory_space<vmem>>, vector<32x16xf32>
    %cst_93 = arith.constant dense<0.000000e+00> : vector<16x16xf32>
    %287 = tpu.matmul %285, %286, %cst_93 {dimension_numbers = #tpu.dot_dimension_numbers<[1], [0], [0], [1], [0, 0, 1, 1], [], []>} : vector<16x32xf32>, vector<32x16xf32>, vector<16x16xf32> -> vector<16x16xf32>
    %c3_94 = arith.constant 3 : index
    %c96_95 = arith.constant 96 : index
    %288 = vector.load %arg3[%c3_94, %c96_95] : memref<88x128xf32, #tpu.memory_space<vmem>>, vector<1x16xf32>
    %289 = vector.broadcast %288 : vector<1x16xf32> to vector<16x16xf32>
    %290 = arith.addf %287, %289 : vector<16x16xf32>
    %291 = arith.addf %278, %290 : vector<16x16xf32>
    %c4_96 = arith.constant 4 : index
    %c32_97 = arith.constant 32 : index
    %292 = vector.load %arg3[%c4_96, %c32_97] : memref<88x128xf32, #tpu.memory_space<vmem>>, vector<1x16xf32>
    %c4_98 = arith.constant 4 : index
    %c48_99 = arith.constant 48 : index
    %293 = vector.load %arg3[%c4_98, %c48_99] : memref<88x128xf32, #tpu.memory_space<vmem>>, vector<1x16xf32>
    %cst_100 = arith.constant dense<0.000000e+00> : vector<16xf32>
    %294 = vector.multi_reduction <add>, %291, %cst_100 [1] : vector<16x16xf32> to vector<16xf32>
    %295 = vector.shape_cast %294 : vector<16xf32> to vector<16x1xf32>
    %cst_101 = arith.constant 1.600000e+01 : f32
    %296 = vector.broadcast %cst_101 : f32 to vector<16x1xf32>
    %297 = arith.divf %295, %296 : vector<16x1xf32>
    %298 = vector.broadcast %297 : vector<16x1xf32> to vector<16x16xf32>
    %299 = arith.subf %291, %298 : vector<16x16xf32>
    %300 = arith.mulf %299, %299 : vector<16x16xf32>
    %cst_102 = arith.constant dense<0.000000e+00> : vector<16xf32>
    %301 = vector.multi_reduction <add>, %300, %cst_102 [1] : vector<16x16xf32> to vector<16xf32>
    %302 = vector.shape_cast %301 : vector<16xf32> to vector<16x1xf32>
    %cst_103 = arith.constant 1.600000e+01 : f32
    %303 = vector.broadcast %cst_103 : f32 to vector<16x1xf32>
    %304 = arith.divf %302, %303 : vector<16x1xf32>
    %305 = vector.broadcast %297 : vector<16x1xf32> to vector<16x16xf32>
    %306 = arith.subf %291, %305 : vector<16x16xf32>
    %cst_104 = arith.constant 9.99999974E-6 : f32
    %307 = vector.broadcast %cst_104 : f32 to vector<16x1xf32>
    %308 = arith.addf %304, %307 : vector<16x1xf32>
    %309 = math.rsqrt %308 : vector<16x1xf32>
    %310 = vector.broadcast %309 : vector<16x1xf32> to vector<16x16xf32>
    %311 = arith.mulf %306, %310 : vector<16x16xf32>
    %312 = vector.broadcast %292 : vector<1x16xf32> to vector<16x16xf32>
    %313 = arith.mulf %311, %312 : vector<16x16xf32>
    %314 = vector.broadcast %293 : vector<1x16xf32> to vector<16x16xf32>
    %315 = arith.addf %313, %314 : vector<16x16xf32>
    %316 = vector.extract_strided_slice %315 {offsets = [11, 0], sizes = [1, 16], strides = [1, 1]} : vector<16x16xf32> to vector<1x16xf32>
    %317 = vector.extract_strided_slice %315 {offsets = [12, 0], sizes = [1, 16], strides = [1, 1]} : vector<16x16xf32> to vector<1x16xf32>
    %318 = tpu.concatenate %316, %317 in 1 : vector<1x16xf32>, vector<1x16xf32> -> vector<1x32xf32>
    %319 = vector.extract_strided_slice %315 {offsets = [14, 0], sizes = [1, 16], strides = [1, 1]} : vector<16x16xf32> to vector<1x16xf32>
    %320 = vector.extract_strided_slice %315 {offsets = [15, 0], sizes = [1, 16], strides = [1, 1]} : vector<16x16xf32> to vector<1x16xf32>
    %321 = tpu.concatenate %319, %320 in 1 : vector<1x16xf32>, vector<1x16xf32> -> vector<1x32xf32>
    %322 = tpu.concatenate %318, %321 in 0 : vector<1x32xf32>, vector<1x32xf32> -> vector<2x32xf32>
    %c56_105 = arith.constant 56 : index
    %c32_106 = arith.constant 32 : index
    %323 = vector.load %arg3[%c56_105, %c32_106] : memref<88x128xf32, #tpu.memory_space<vmem>>, vector<32x8xf32>
    %cst_107 = arith.constant dense<0.000000e+00> : vector<2x8xf32>
    %324 = tpu.matmul %322, %323, %cst_107 {dimension_numbers = #tpu.dot_dimension_numbers<[1], [0], [0], [1], [0, 0, 1, 1], [], []>} : vector<2x32xf32>, vector<32x8xf32>, vector<2x8xf32> -> vector<2x8xf32>
    %c0_108 = arith.constant 0 : index
    %c32_109 = arith.constant 32 : index
    %325 = vector.load %arg3[%c0_108, %c32_109] : memref<88x128xf32, #tpu.memory_space<vmem>>, vector<1x8xf32>
    %326 = vector.broadcast %325 : vector<1x8xf32> to vector<2x8xf32>
    %327 = arith.addf %324, %326 : vector<2x8xf32>
    %c0_110 = arith.constant 0 : index
    %c0_111 = arith.constant 0 : index
    %328 = vector.load %arg4[%c0_110, %c0_111] : memref<2x8xf32, #tpu.memory_space<vmem>>, vector<2x8xf32>
    tpu.vector_store %arg4[%c0_110, %c0_111], %327 {strides = array<i32>} : memref<2x8xf32, #tpu.memory_space<vmem>>, vector<2x8xf32>,
    return
  }
}

</mosaic_0001>

<llo_original>
// kernel: fwd.1
$region0: #{fwd.1}
  #allocation0 [shape = 'u32[]', space=smem, size = 0x4, offset = 0x4, fixed_abs, tag = 'smem constant byte address 0x4 - core index']
  #allocation1 [shape = 'u32[144,128]{1,0:T(1,128)}', space=vmem, size = 0x12000, scoped, tag = 'internal scratch']
  %s0 = inlined_call_operand.vmem [shape: f32[10,2], index: 0, kind: input, shape index: {}]
  %s1 = inlined_call_operand.vmem [shape: f32[6,4], index: 1, kind: input, shape index: {}]
  %s2 = inlined_call_operand.vmem [shape: f32[1,10], index: 2, kind: input, shape index: {}]
  %s3 = inlined_call_operand.hbm [shape: f32[88,128], index: 3, kind: input, shape index: {}]
  %s4 = inlined_call_operand.vmem [shape: f32[2,8], index: 4, kind: output, shape index: {}]
  %s5 = sld [smem:[#allocation0]]
  $region30: #{fwd.1} parent=0
    _
  %s7 = ssub.s32 1, %s5
  %s8 = scalar_select 0, %s7, %s5
  $region1: #{fwd.1} parent=0
    #allocation2 [shape = 'u8[45056]{0}', space=vmem, size = 0xb000, scoped, tag = 'input window, operand 3, single buffered']
    #allocation3 [shape = 's32[1]{0}', space=sflag, size = 0x4, scoped, tag = 'scoped memory for fwd.1']
    %9 = vsyncpa [#allocation3], 0
    // Predicated region
    $region2: #{fwd.1} parent=1 // pred_check
      _
    $region3: #{fwd.1} parent=1 // pred_check_branch
      %11 = sbr.rel (0) target = $region5
    $region4: #{fwd.1} parent=1 // pred_region
      _
    $region5: #{fwd.1} parent=1 // pred_fallthru
      _
    // Predicated region
    $region6: #{fwd.1} parent=1 // pred_check
      _
    $region7: #{fwd.1} parent=1 // pred_check_branch
      %13 = sbr.rel (0) target = $region9
    $region8: #{fwd.1} parent=1 // pred_region
      _
    $region9: #{fwd.1} parent=1 // pred_fallthru
      _
    // Predicated region
    $region10: #{fwd.1} parent=1 // pred_check
      _
    $region11: #{fwd.1} parent=1 // pred_check_branch
      %15 = sbr.rel (0) target = $region13
    $region12: #{fwd.1} parent=1 // pred_region
      _
    $region13: #{fwd.1} parent=1 // pred_fallthru
      _
    // Predicated region
    $region14: #{fwd.1} parent=1 // pred_check
      _
    $region15: #{fwd.1} parent=1 // pred_check_branch
      %17 = sbr.rel (0) target = $region17
    $region16: #{fwd.1} parent=1 // pred_region
      %s19 = ssub.s32 1408, 1408
      %20 = vsyncadd [#allocation3], %s19
      %s21 = sshll.u32 [#allocation2], 4
      %s22 = int_to_ptr.vmem [resolvable:$true] %s21
      %27 = dma.hbm_to_vmem [thread:$0]  %s3, 1408, %s22, [#allocation3], 128, 128, 8
    $region17: #{fwd.1} parent=1 // pred_fallthru
      _
    // Predicated region
    $region18: #{fwd.1} parent=1 // pred_check
      _
    $region19: #{fwd.1} parent=1 // pred_check_branch
      %29 = sbr.rel (0) target = $region21
    $region20: #{fwd.1} parent=1 // pred_region
      %30 = dma.done [#allocation3], 1408
    $region21: #{fwd.1} parent=1 // pred_fallthru
      _
    %v31 = vld [vmem:[%s0] sm:$0xff]
    %v32 = vld [vmem:[%s0 + $0x8] sm:$0x3]
    %v33 = vld [vmem:[#allocation2 + $0x8] sm:$0x3]
    %v34 = vld [vmem:[#allocation2] sm:$0x1]
    %36 = vset.pattern.permute.xlu0 0
    %37 = vperm.xlu0 %36, %v31
    %v38 = vpop.permute.xlu0 %37
    %41 = vset.pattern.permute.xlu0 0
    %42 = vperm.xlu0 %41, %v32
    %v43 = vpop.permute.xlu0 %42
    %v45 = vlaneseq
    %v46 = vshrl.u32 %v45, 7
    %v47 = vsub.s32 0, %v46
    %v48 = vrot.slane %v33, %v47
    %v49 = vmul.f32 %v38, %v48
    %v50 = vmul.f32 %v43, %v48
    %v51 = vlaneseq
    %v52 = vshrl.u32 %v51, 7
    %v53 = vsub.s32 0, %v52
    %v54 = vrot.slane %v34, %v53
    %v55 = vadd.f32 %v54, %v49
    %v56 = vadd.f32 %v54, %v50
    %57 = vset.pattern.permute.xlu0 1
    %58 = vperm.xlu0 %57, %v31
    %v59 = vpop.permute.xlu0 %58
    %61 = vset.pattern.permute.xlu0 1
    %62 = vperm.xlu0 %61, %v32
    %v63 = vpop.permute.xlu0 %62
    %v65 = vlaneseq
    %v66 = vshrl.u32 %v65, 7
    %v67 = vsub.s32 1, %v66
    %v68 = vrot.slane %v33, %v67
    %v69 = vmul.f32 %v59, %v68
    %v70 = vmul.f32 %v63, %v68
    %v71 = vadd.f32 %v55, %v69
    %v72 = vadd.f32 %v56, %v70
    %v73 = vmax.f32 %v71, 0.0
    %v74 = vmax.f32 %v72, 0.0
    %v75 = vld [vmem:[%s1] sm:$0x3f]
    %v76 = vld [vmem:[#allocation2 + $0x8] sm:$0xf]
    %78 = vset.pattern.permute.xlu0 0
    %79 = vperm.xlu0 %78, %v75
    %v80 = vpop.permute.xlu0 %79
    %v82 = vlaneseq
    %v83 = vshrl.u32 %v82, 7
    %v84 = vsub.s32 0, %v83
    %v85 = vrot.slane %v76, %v84
    %v86 = vmul.f32 %v80, %v85
    %v87 = vadd.f32 %v54, %v86
    %88 = vset.pattern.permute.xlu0 1
    %89 = vperm.xlu0 %88, %v75
    %v90 = vpop.permute.xlu0 %89
    %v92 = vlaneseq
    %v93 = vshrl.u32 %v92, 7
    %v94 = vsub.s32 1, %v93
    %v95 = vrot.slane %v76, %v94
    %v96 = vmul.f32 %v90, %v95
    %v97 = vadd.f32 %v87, %v96
    %98 = vset.pattern.permute.xlu0 2
    %99 = vperm.xlu0 %98, %v75
    %v100 = vpop.permute.xlu0 %99
    %v102 = vlaneseq
    %v103 = vshrl.u32 %v102, 7
    %v104 = vsub.s32 2, %v103
    %v105 = vrot.slane %v76, %v104
    %v106 = vmul.f32 %v100, %v105
    %v107 = vadd.f32 %v97, %v106
    %108 = vset.pattern.permute.xlu0 3
    %109 = vperm.xlu0 %108, %v75
    %v110 = vpop.permute.xlu0 %109
    %v112 = vlaneseq
    %v113 = vshrl.u32 %v112, 7
    %v114 = vsub.s32 3, %v113
    %v115 = vrot.slane %v76, %v114
    %v116 = vmul.f32 %v110, %v115
    %v117 = vadd.f32 %v107, %v116
    %v118 = vmax.f32 %v117, 0.0
    %v119 = vld [vmem:[#allocation2 + $0x10] sm:$0x3f]
    %121 = vrot.lane.b32.xlu0 %v119, 16
    %v122 = vpop.permute.xlu0 %121
    %v124 = vadd.f32 %v118, %v122
    %v126 = vrot.slane %v124, 6
    %127 = vrot.lane.b32.xlu0 %v126, 112
    %v128 = vpop.permute.xlu0 %127
    %vm130 = vcmask 1041408
    %v131 = vsel %vm130, %v74, %v128
    %v132 = vld [vmem:[%s2] sm:$0x1]
    %v133 = vsub.f32 1.0, %v132
    %v134 = vmul.f32 %v133, -1e+30
    %vm135 = vcmask 80896
    %v136 = vsel %vm135, %v134, 0.0
    %v137 = vlaneseq
    %v138 = vshrl.u32 %v137, 7
    %v139 = vadd.s32 %v138, 8
    %v140 = vadd.s32 %v138, 16
    %v141 = vadd.s32 %v138, 24
    %vm142 = vcmp.ge.s32.totalorder %v138, 16
    %vm143 = vcmp.ge.s32.totalorder %v139, 16
    %vm144 = vcmp.ge.s32.totalorder %v140, 16
    %vm145 = vcmp.ge.s32.totalorder %v141, 16
    %v146 = vsub.s32 %v138, 16
    %v147 = vsub.s32 %v139, 16
    %v148 = vsub.s32 %v141, 16
    %v149 = vsel %vm142, %v146, %v138
    %v150 = vsel %vm143, %v147, %v139
    %v151 = vsel %vm144, %v138, %v140
    %v152 = vsel %vm145, %v148, %v141
    %v153 = vlaneseq
    %v154 = vand.u32 %v153, 127
    %vm155 = vcmp.ge.s32.totalorder %v149, 5
    %vm156 = vcmp.ge.s32.totalorder %v150, 5
    %vm157 = vcmp.ge.s32.totalorder %v151, 5
    %vm158 = vcmp.ge.s32.totalorder %v152, 5
    %v159 = vsel %vm155, 1, 0
    %v160 = vsel %vm156, 1, 0
    %v161 = vsel %vm157, 1, 0
    %v162 = vsel %vm158, 1, 0
    %vm163 = vcmp.ge.s32.totalorder %v149, 13
    %vm164 = vcmp.ge.s32.totalorder %v150, 13
    %vm165 = vcmp.ge.s32.totalorder %v151, 13
    %vm166 = vcmp.ge.s32.totalorder %v152, 13
    %v167 = vsel %vm163, 1, 0
    %v168 = vsel %vm164, 1, 0
    %v169 = vsel %vm165, 1, 0
    %v170 = vsel %vm166, 1, 0
    %vm171 = vcmp.lt.s32.totalorder %v149, 10
    %vm172 = vcmp.lt.s32.totalorder %v150, 10
    %vm173 = vcmp.lt.s32.totalorder %v151, 10
    %vm174 = vcmp.lt.s32.totalorder %v152, 10
    %v175 = vsel %vm171, %v159, %v167
    %v176 = vsel %vm172, %v160, %v168
    %v177 = vsel %vm173, %v161, %v169
    %v178 = vsel %vm174, %v162, %v170
    %vm179 = vcmp.ge.s32.totalorder %v154, 5
    %v180 = vsel %vm179, 1, 0
    %vm181 = vcmp.ge.s32.totalorder %v154, 13
    %v182 = vsel %vm181, 1, 0
    %vm183 = vcmp.lt.s32.totalorder %v154, 10
    %v184 = vsel %vm183, %v180, %v182
    %vm185 = vcmp.eq.s32.totalorder %v175, %v184
    %vm186 = vcmp.eq.s32.totalorder %v176, %v184
    %vm187 = vcmp.eq.s32.totalorder %v177, %v184
    %vm188 = vcmp.eq.s32.totalorder %v178, %v184
    %v189 = vsel %vm185, 0.0, -1e+30
    %v190 = vsel %vm186, 0.0, -1e+30
    %v191 = vsel %vm187, 0.0, -1e+30
    %v192 = vsel %vm188, 0.0, -1e+30
    %v193 = vlaneseq
    %v194 = vshrl.u32 %v193, 7
    %v195 = vsub.s32 0, %v194
    %v196 = vrot.slane %v136, %v195
    %v197 = vadd.f32 %v189, %v196
    %v198 = vadd.f32 %v190, %v196
    %v199 = vadd.f32 %v191, %v196
    %v200 = vadd.f32 %v192, %v196
    %vm201 = vcmp.ge.s32.totalorder %v154, 0
    %vm202 = vcmp.lt.s32.totalorder %v154, 8
    %vm203 = vmand %vm201, %vm202
    %v204 = vsel %vm203, 1, 0
    %v205 = vcvt.s32.f32 %v204
    %vm206 = vcmp.ge.s32.totalorder %v154, 8
    %vm207 = vcmp.lt.s32.totalorder %v154, 16
    %vm208 = vmand %vm206, %vm207
    %v209 = vsel %vm208, 1, 0
    %v210 = vcvt.s32.f32 %v209
    %v211 = vld [vmem:[#allocation2 + $0x18] sm:$0xff]
    %v212 = vld [vmem:[#allocation2 + $0x20] sm:$0xff]
    %v213 = vld [vmem:[#allocation2 + $0x1] sm:$0x1]
    %v214 = vlaneseq
    %v215 = vshrl.u32 %v214, 7
    %v216 = vsub.s32 0, %v215
    %v217 = vrot.slane %v213, %v216
    %vm218 = vcmask 130048
    %v220 = vsel %vm218, %v73, 0
    %v223 = vsel %vm218, %v131, 0
    %225 = vmatprep.subr.mxu0 0.0
    %226 = vmatpush1.msra.mxu0 %v211
    %227 = vmatprep.subr.mxu0 0.0
    %228 = vmatpush1.msra.mxu0 %v212
    %229 = vmatprep.subr.mxu0 0.0
    %230 = vmatpush1.msra.mxu0 0.0
    %231 = vmatprep.subr.mxu0 0.0
    %232 = vmatpush1.msra.mxu0 0.0
    %233 = vmatprep.subr.mxu0 0.0
    %234 = vmatpush1.msra.mxu0 0.0
    %235 = vmatprep.subr.mxu0 0.0
    %236 = vmatpush1.msra.mxu0 0.0
    %237 = vmatprep.subr.mxu0 0.0
    %238 = vmatpush1.msra.mxu0 0.0
    %239 = vmatprep.subr.mxu0 0.0
    %240 = vmatpush1.msra.mxu0 0.0
    %241 = vmatprep.subr.mxu0 0.0
    %242 = vmatpush1.msra.mxu0 0.0
    %243 = vmatprep.subr.mxu0 0.0
    %244 = vmatpush1.msra.mxu0 0.0
    %245 = vmatprep.subr.mxu0 0.0
    %246 = vmatpush1.msra.mxu0 0.0
    %247 = vmatprep.subr.mxu0 0.0
    %248 = vmatpush1.msra.mxu0 0.0
    %249 = vmatprep.subr.mxu0 0.0
    %250 = vmatpush1.msra.mxu0 0.0
    %251 = vmatprep.subr.mxu0 0.0
    %252 = vmatpush1.msra.mxu0 0.0
    %253 = vmatprep.subr.mxu0 0.0
    %254 = vmatpush1.msra.mxu0 0.0
    %255 = vmatprep.subr.mxu0 0.0
    %256 = vmatpush1.msra.mxu0 0.0
    %257 = vmatprep.subr.mxu0 0.0
    %258 = vmatpush1.msra.mxu0 0.0
    %259 = vmatprep.subr.mxu0 0.0
    %260 = vmatpush1.msra.mxu0 0.0
    %261 = vmatprep.subr.mxu0 0.0
    %262 = vmatpush1.msra.mxu0 0.0
    %263 = vmatprep.subr.mxu0 0.0
    %264 = vmatpush1.msra.mxu0 0.0
    %265 = vmatprep.subr.mxu0 0.0
    %266 = vmatpush1.msra.mxu0 0.0
    %267 = vmatprep.subr.mxu0 0.0
    %268 = vmatpush1.msra.mxu0 0.0
    %269 = vmatprep.subr.mxu0 0.0
    %270 = vmatpush1.msra.mxu0 0.0
    %271 = vmatprep.subr.mxu0 0.0
    %272 = vmatpush1.msra.mxu0 0.0
    %273 = vmatprep.subr.mxu0 0.0
    %274 = vmatpush1.msra.mxu0 0.0
    %275 = vmatprep.subr.mxu0 0.0
    %276 = vmatpush1.msra.mxu0 0.0
    %277 = vmatprep.subr.mxu0 0.0
    %278 = vmatpush1.msra.mxu0 0.0
    %279 = vmatprep.subr.mxu0 0.0
    %280 = vmatpush1.msra.mxu0 0.0
    %281 = vmatprep.subr.mxu0 0.0
    %282 = vmatpush1.msra.mxu0 0.0
    %283 = vmatprep.subr.mxu0 0.0
    %284 = vmatpush1.msra.mxu0 0.0
    %285 = vmatprep.subr.mxu0 0.0
    %286 = vmatpush1.msra.mxu0 0.0
    %287 = vmatprep.subr.mxu0 0.0
    %288 = vmatpush1.msra.mxu0 0.0
    %289 = vmatprep.mubr.f32.mxu0 0.0
    %290 = vmatmul.mubr.f32.gmra.mrb[0].mxu0 %v220
    %v291 = vpop.f32.mrb[0].mxu0
    %v292 = vadd.f32 %v217, %v291
    %v293 = vpop.f32.mrb[0].mxu0
    %294 = vmatprep.mubr.f32.mxu0 0.0
    %295 = vmatmul.mubr.f32.gmra.mrb[0].mxu0 %v223
    %v296 = vpop.f32.mrb[0].mxu0
    %v297 = vadd.f32 %v217, %v296
    %v298 = vpop.f32.mrb[0].mxu0
    %299 = vdwg.mxu0
    %v300 = vmul.f32 %v292, %v205
    %v301 = vmul.f32 %v297, %v205
    %v302 = vmul.f32 %v292, %v210
    %v303 = vmul.f32 %v297, %v210
    %306 = vrot.lane.b32.xlu0 %v292, 112
    %v307 = vpop.permute.xlu0 %306
    %308 = vrot.lane.b32.xlu0 %v297, 112
    %v309 = vpop.permute.xlu0 %308
    %v311 = vsel %vm218, %v300, 0
    %v314 = vsel %vm218, %v301, 0
    %v317 = vsel %vm218, %v302, 0
    %v320 = vsel %vm218, %v303, 0
    %v322 = vsel %vm218, %v307, 0
    %v324 = vsel %vm218, %v309, 0
    %326 = vmatprep.subr.mxu0 0.0
    %327 = vmatpush1.xpose.msra.mxu0 %v322
    %328 = vmatprep.subr.mxu0 0.0
    %329 = vmatpush1.xpose.msra.mxu0 %v324
    %330 = vmatprep.subr.mxu0 0.0
    %331 = vmatpush1.xpose.msra.mxu0 0.0
    %332 = vmatprep.subr.mxu0 0.0
    %333 = vmatpush1.xpose.msra.mxu0 0.0
    %334 = vmatprep.subr.mxu0 0.0
    %335 = vmatpush1.xpose.msra.mxu0 0.0
    %336 = vmatprep.subr.mxu0 0.0
    %337 = vmatpush1.xpose.msra.mxu0 0.0
    %338 = vmatprep.subr.mxu0 0.0
    %339 = vmatpush1.xpose.msra.mxu0 0.0
    %340 = vmatprep.subr.mxu0 0.0
    %341 = vmatpush1.xpose.msra.mxu0 0.0
    %342 = vmatprep.subr.mxu0 0.0
    %343 = vmatpush1.xpose.msra.mxu0 0.0
    %344 = vmatprep.subr.mxu0 0.0
    %345 = vmatpush1.xpose.msra.mxu0 0.0
    %346 = vmatprep.subr.mxu0 0.0
    %347 = vmatpush1.xpose.msra.mxu0 0.0
    %348 = vmatprep.subr.mxu0 0.0
    %349 = vmatpush1.xpose.msra.mxu0 0.0
    %350 = vmatprep.subr.mxu0 0.0
    %351 = vmatpush1.xpose.msra.mxu0 0.0
    %352 = vmatprep.subr.mxu0 0.0
    %353 = vmatpush1.xpose.msra.mxu0 0.0
    %354 = vmatprep.subr.mxu0 0.0
    %355 = vmatpush1.xpose.msra.mxu0 0.0
    %356 = vmatprep.subr.mxu0 0.0
    %357 = vmatpush1.xpose.msra.mxu0 0.0
    %358 = vmatprep.subr.mxu0 0.0
    %359 = vmatpush1.xpose.msra.mxu0 0.0
    %360 = vmatprep.subr.mxu0 0.0
    %361 = vmatpush1.xpose.msra.mxu0 0.0
    %362 = vmatprep.subr.mxu0 0.0
    %363 = vmatpush1.xpose.msra.mxu0 0.0
    %364 = vmatprep.subr.mxu0 0.0
    %365 = vmatpush1.xpose.msra.mxu0 0.0
    %366 = vmatprep.subr.mxu0 0.0
    %367 = vmatpush1.xpose.msra.mxu0 0.0
    %368 = vmatprep.subr.mxu0 0.0
    %369 = vmatpush1.xpose.msra.mxu0 0.0
    %370 = vmatprep.subr.mxu0 0.0
    %371 = vmatpush1.xpose.msra.mxu0 0.0
    %372 = vmatprep.subr.mxu0 0.0
    %373 = vmatpush1.xpose.msra.mxu0 0.0
    %374 = vmatprep.subr.mxu0 0.0
    %375 = vmatpush1.xpose.msra.mxu0 0.0
    %376 = vmatprep.subr.mxu0 0.0
    %377 = vmatpush1.xpose.msra.mxu0 0.0
    %378 = vmatprep.subr.mxu0 0.0
    %379 = vmatpush1.xpose.msra.mxu0 0.0
    %380 = vmatprep.subr.mxu0 0.0
    %381 = vmatpush1.xpose.msra.mxu0 0.0
    %382 = vmatprep.subr.mxu0 0.0
    %383 = vmatpush1.xpose.msra.mxu0 0.0
    %384 = vmatprep.subr.mxu0 0.0
    %385 = vmatpush1.xpose.msra.mxu0 0.0
    %386 = vmatprep.subr.mxu0 0.0
    %387 = vmatpush1.xpose.msra.mxu0 0.0
    %388 = vmatprep.subr.mxu0 0.0
    %389 = vmatpush1.xpose.msra.mxu0 0.0
    %390 = vmatprep.mubr.f32.mxu0 0.0
    %391 = vmatmul.mubr.f32.gmra.mrb[0].mxu0 %v311
    %v392 = vpop.f32.mrb[0].mxu0
    %v393 = vadd.f32 0.0, %v392
    %v394 = vpop.f32.mrb[0].mxu0
    %395 = vmatprep.mubr.f32.mxu0 0.0
    %396 = vmatmul.mubr.f32.gmra.mrb[0].mxu0 %v314
    %v397 = vpop.f32.mrb[0].mxu0
    %v398 = vadd.f32 0.0, %v397
    %v399 = vpop.f32.mrb[0].mxu0
    %400 = vmatprep.mubr.f32.mxu0 0.0
    %401 = vmatmul.mubr.f32.gmra.mrb[0].mxu0 %v317
    %v402 = vpop.f32.mrb[0].mxu0
    %v403 = vadd.f32 0.0, %v402
    %v404 = vpop.f32.mrb[0].mxu0
    %405 = vmatprep.mubr.f32.mxu0 0.0
    %406 = vmatmul.mubr.f32.gmra.mrb[0].mxu0 %v320
    %v407 = vpop.f32.mrb[0].mxu0
    %v408 = vadd.f32 0.0, %v407
    %v409 = vpop.f32.mrb[0].mxu0
    %410 = vdwg.mxu0
    %v411 = vmul.f32 %v393, 0.35355338
    %v412 = vmul.f32 %v398, 0.35355338
    %v413 = vmul.f32 %v403, 0.35355338
    %v414 = vmul.f32 %v408, 0.35355338
    %v415 = vadd.f32 %v411, %v197
    %v416 = vadd.f32 %v412, %v198
    %v417 = vadd.f32 %v413, %v199
    %v418 = vadd.f32 %v414, %v200
    %v419 = vsel %vm218, %v415, -inf
    %420 = vmax.xlane.f32.xlu0 %v419
    %v421 = vpop.xlane.xlu0 %420
    %v422 = vsel %vm218, %v416, -inf
    %423 = vmax.xlane.f32.xlu0 %v422
    %v424 = vpop.xlane.xlu0 %423
    %v425 = vsel %vm218, %v417, -inf
    %426 = vmax.xlane.f32.xlu0 %v425
    %v427 = vpop.xlane.xlu0 %426
    %v428 = vsel %vm218, %v418, -inf
    %429 = vmax.xlane.f32.xlu0 %v428
    %v430 = vpop.xlane.xlu0 %429
    %v431 = vsub.f32 %v415, %v421
    %v432 = vsub.f32 %v416, %v424
    %v433 = vsub.f32 %v417, %v427
    %v434 = vsub.f32 %v418, %v430
    %v435 = vmul.f32 %v431, 1.442695
    %v436 = vpow.pop %v435
    %v437 = vmul.f32 %v432, 1.442695
    %v438 = vpow.pop %v437
    %v439 = vmul.f32 %v433, 1.442695
    %v440 = vpow.pop %v439
    %v441 = vmul.f32 %v434, 1.442695
    %v442 = vpow.pop %v441
    %v443 = vsel %vm218, %v436, 0.0
    %444 = vadd.xlane.f32.xlu0 %v443
    %v445 = vpop.xlane.xlu0 %444
    %v446 = vsel %vm218, %v438, 0.0
    %447 = vadd.xlane.f32.xlu0 %v446
    %v448 = vpop.xlane.xlu0 %447
    %v449 = vsel %vm218, %v440, 0.0
    %450 = vadd.xlane.f32.xlu0 %v449
    %v451 = vpop.xlane.xlu0 %450
    %v452 = vsel %vm218, %v442, 0.0
    %453 = vadd.xlane.f32.xlu0 %v452
    %v454 = vpop.xlane.xlu0 %453
    %v455 = vrcp.pop %v445
    %v456 = vrcp.pop %v448
    %v457 = vrcp.pop %v451
    %v458 = vrcp.pop %v454
    %v459 = vmul.f32 %v436, %v455
    %v460 = vmul.f32 %v438, %v456
    %v461 = vmul.f32 %v440, %v457
    %v462 = vmul.f32 %v442, %v458
    %463 = vrot.lane.b32.xlu0 %v292, 96
    %v464 = vpop.permute.xlu0 %463
    %465 = vrot.lane.b32.xlu0 %v297, 96
    %v466 = vpop.permute.xlu0 %465
    %v470 = vsel %vm218, %v459, 0
    %v473 = vsel %vm218, %v460, 0
    %v476 = vsel %vm218, %v461, 0
    %v479 = vsel %vm218, %v462, 0
    %481 = vmatprep.subr.mxu0 0.0
    %482 = vmatpush1.msra.mxu0 %v464
    %483 = vmatprep.subr.mxu0 0.0
    %484 = vmatpush1.msra.mxu0 %v466
    %485 = vmatprep.subr.mxu0 0.0
    %486 = vmatpush1.msra.mxu0 0.0
    %487 = vmatprep.subr.mxu0 0.0
    %488 = vmatpush1.msra.mxu0 0.0
    %489 = vmatprep.subr.mxu0 0.0
    %490 = vmatpush1.msra.mxu0 0.0
    %491 = vmatprep.subr.mxu0 0.0
    %492 = vmatpush1.msra.mxu0 0.0
    %493 = vmatprep.subr.mxu0 0.0
    %494 = vmatpush1.msra.mxu0 0.0
    %495 = vmatprep.subr.mxu0 0.0
    %496 = vmatpush1.msra.mxu0 0.0
    %497 = vmatprep.subr.mxu0 0.0
    %498 = vmatpush1.msra.mxu0 0.0
    %499 = vmatprep.subr.mxu0 0.0
    %500 = vmatpush1.msra.mxu0 0.0
    %501 = vmatprep.subr.mxu0 0.0
    %502 = vmatpush1.msra.mxu0 0.0
    %503 = vmatprep.subr.mxu0 0.0
    %504 = vmatpush1.msra.mxu0 0.0
    %505 = vmatprep.subr.mxu0 0.0
    %506 = vmatpush1.msra.mxu0 0.0
    %507 = vmatprep.subr.mxu0 0.0
    %508 = vmatpush1.msra.mxu0 0.0
    %509 = vmatprep.subr.mxu0 0.0
    %510 = vmatpush1.msra.mxu0 0.0
    %511 = vmatprep.subr.mxu0 0.0
    %512 = vmatpush1.msra.mxu0 0.0
    %513 = vmatprep.subr.mxu0 0.0
    %514 = vmatpush1.msra.mxu0 0.0
    %515 = vmatprep.subr.mxu0 0.0
    %516 = vmatpush1.msra.mxu0 0.0
    %517 = vmatprep.subr.mxu0 0.0
    %518 = vmatpush1.msra.mxu0 0.0
    %519 = vmatprep.subr.mxu0 0.0
    %520 = vmatpush1.msra.mxu0 0.0
    %521 = vmatprep.subr.mxu0 0.0
    %522 = vmatpush1.msra.mxu0 0.0
    %523 = vmatprep.subr.mxu0 0.0
    %524 = vmatpush1.msra.mxu0 0.0
    %525 = vmatprep.subr.mxu0 0.0
    %526 = vmatpush1.msra.mxu0 0.0
    %527 = vmatprep.subr.mxu0 0.0
    %528 = vmatpush1.msra.mxu0 0.0
    %529 = vmatprep.subr.mxu0 0.0
    %530 = vmatpush1.msra.mxu0 0.0
    %531 = vmatprep.subr.mxu0 0.0
    %532 = vmatpush1.msra.mxu0 0.0
    %533 = vmatprep.subr.mxu0 0.0
    %534 = vmatpush1.msra.mxu0 0.0
    %535 = vmatprep.subr.mxu0 0.0
    %536 = vmatpush1.msra.mxu0 0.0
    %537 = vmatprep.subr.mxu0 0.0
    %538 = vmatpush1.msra.mxu0 0.0
    %539 = vmatprep.subr.mxu0 0.0
    %540 = vmatpush1.msra.mxu0 0.0
    %541 = vmatprep.subr.mxu0 0.0
    %542 = vmatpush1.msra.mxu0 0.0
    %543 = vmatprep.subr.mxu0 0.0
    %544 = vmatpush1.msra.mxu0 0.0
    %545 = vmatprep.mubr.f32.mxu0 0.0
    %546 = vmatmul.mubr.f32.gmra.mrb[0].mxu0 %v470
    %v547 = vpop.f32.mrb[0].mxu0
    %v548 = vadd.f32 0.0, %v547
    %v549 = vpop.f32.mrb[0].mxu0
    %550 = vmatprep.mubr.f32.mxu0 0.0
    %551 = vmatmul.mubr.f32.gmra.mrb[0].mxu0 %v473
    %v552 = vpop.f32.mrb[0].mxu0
    %v553 = vadd.f32 0.0, %v552
    %v554 = vpop.f32.mrb[0].mxu0
    %555 = vmatprep.mubr.f32.mxu0 0.0
    %556 = vmatmul.mubr.f32.gmra.mrb[0].mxu0 %v476
    %v557 = vpop.f32.mrb[0].mxu0
    %v558 = vadd.f32 0.0, %v557
    %v559 = vpop.f32.mrb[0].mxu0
    %560 = vmatprep.mubr.f32.mxu0 0.0
    %561 = vmatmul.mubr.f32.gmra.mrb[0].mxu0 %v479
    %v562 = vpop.f32.mrb[0].mxu0
    %v563 = vadd.f32 0.0, %v562
    %v564 = vpop.f32.mrb[0].mxu0
    %565 = vdwg.mxu0
    %v566 = vmul.f32 %v548, %v205
    %v567 = vmul.f32 %v553, %v205
    %v568 = vmul.f32 %v558, %v210
    %v569 = vmul.f32 %v563, %v210
    %v570 = vadd.f32 %v566, %v568
    %v571 = vadd.f32 %v567, %v569
    %574 = vrot.lane.b32.xlu0 %v211, 32
    %v575 = vpop.permute.xlu0 %574
    %576 = vrot.lane.b32.xlu0 %v212, 32
    %v577 = vpop.permute.xlu0 %576
    %581 = vrot.lane.b32.xlu0 %v217, 80
    %v582 = vpop.permute.xlu0 %581
    %v585 = vsel %vm218, %v570, 0
    %v588 = vsel %vm218, %v571, 0
    %590 = vmatprep.subr.mxu0 0.0
    %591 = vmatpush1.msra.mxu0 %v575
    %592 = vmatprep.subr.mxu0 0.0
    %593 = vmatpush1.msra.mxu0 %v577
    %594 = vmatprep.subr.mxu0 0.0
    %595 = vmatpush1.msra.mxu0 0.0
    %596 = vmatprep.subr.mxu0 0.0
    %597 = vmatpush1.msra.mxu0 0.0
    %598 = vmatprep.subr.mxu0 0.0
    %599 = vmatpush1.msra.mxu0 0.0
    %600 = vmatprep.subr.mxu0 0.0
    %601 = vmatpush1.msra.mxu0 0.0
    %602 = vmatprep.subr.mxu0 0.0
    %603 = vmatpush1.msra.mxu0 0.0
    %604 = vmatprep.subr.mxu0 0.0
    %605 = vmatpush1.msra.mxu0 0.0
    %606 = vmatprep.subr.mxu0 0.0
    %607 = vmatpush1.msra.mxu0 0.0
    %608 = vmatprep.subr.mxu0 0.0
    %609 = vmatpush1.msra.mxu0 0.0
    %610 = vmatprep.subr.mxu0 0.0
    %611 = vmatpush1.msra.mxu0 0.0
    %612 = vmatprep.subr.mxu0 0.0
    %613 = vmatpush1.msra.mxu0 0.0
    %614 = vmatprep.subr.mxu0 0.0
    %615 = vmatpush1.msra.mxu0 0.0
    %616 = vmatprep.subr.mxu0 0.0
    %617 = vmatpush1.msra.mxu0 0.0
    %618 = vmatprep.subr.mxu0 0.0
    %619 = vmatpush1.msra.mxu0 0.0
    %620 = vmatprep.subr.mxu0 0.0
    %621 = vmatpush1.msra.mxu0 0.0
    %622 = vmatprep.subr.mxu0 0.0
    %623 = vmatpush1.msra.mxu0 0.0
    %624 = vmatprep.subr.mxu0 0.0
    %625 = vmatpush1.msra.mxu0 0.0
    %626 = vmatprep.subr.mxu0 0.0
    %627 = vmatpush1.msra.mxu0 0.0
    %628 = vmatprep.subr.mxu0 0.0
    %629 = vmatpush1.msra.mxu0 0.0
    %630 = vmatprep.subr.mxu0 0.0
    %631 = vmatpush1.msra.mxu0 0.0
    %632 = vmatprep.subr.mxu0 0.0
    %633 = vmatpush1.msra.mxu0 0.0
    %634 = vmatprep.subr.mxu0 0.0
    %635 = vmatpush1.msra.mxu0 0.0
    %636 = vmatprep.subr.mxu0 0.0
    %637 = vmatpush1.msra.mxu0 0.0
    %638 = vmatprep.subr.mxu0 0.0
    %639 = vmatpush1.msra.mxu0 0.0
    %640 = vmatprep.subr.mxu0 0.0
    %641 = vmatpush1.msra.mxu0 0.0
    %642 = vmatprep.subr.mxu0 0.0
    %643 = vmatpush1.msra.mxu0 0.0
    %644 = vmatprep.subr.mxu0 0.0
    %645 = vmatpush1.msra.mxu0 0.0
    %646 = vmatprep.subr.mxu0 0.0
    %647 = vmatpush1.msra.mxu0 0.0
    %648 = vmatprep.subr.mxu0 0.0
    %649 = vmatpush1.msra.mxu0 0.0
    %650 = vmatprep.subr.mxu0 0.0
    %651 = vmatpush1.msra.mxu0 0.0
    %652 = vmatprep.subr.mxu0 0.0
    %653 = vmatpush1.msra.mxu0 0.0
    %654 = vmatprep.mubr.f32.mxu0 0.0
    %655 = vmatmul.mubr.f32.gmra.mrb[0].mxu0 %v585
    %v656 = vpop.f32.mrb[0].mxu0
    %v657 = vadd.f32 %v582, %v656
    %v658 = vpop.f32.mrb[0].mxu0
    %659 = vmatprep.mubr.f32.mxu0 0.0
    %660 = vmatmul.mubr.f32.gmra.mrb[0].mxu0 %v588
    %v661 = vpop.f32.mrb[0].mxu0
    %v662 = vadd.f32 %v582, %v661
    %v663 = vpop.f32.mrb[0].mxu0
    %664 = vdwg.mxu0
    %v665 = vadd.f32 %v73, %v657
    %v666 = vadd.f32 %v131, %v662
    %v667 = vld [vmem:[#allocation2 + $0x2] sm:$0x1]
    %v668 = vsel %vm218, %v665, 0.0
    %669 = vadd.xlane.f32.xlu0 %v668
    %v670 = vpop.xlane.xlu0 %669
    %v671 = vsel %vm218, %v666, 0.0
    %672 = vadd.xlane.f32.xlu0 %v671
    %v673 = vpop.xlane.xlu0 %672
    %v674 = vrcp.pop 16.0
    %v675 = vmul.f32 %v670, %v674
    %v676 = vmul.f32 %v673, %v674
    %v677 = vsub.f32 %v665, %v675
    %v678 = vsub.f32 %v666, %v676
    %v679 = vmul.f32 %v677, %v677
    %v680 = vmul.f32 %v678, %v678
    %v681 = vsel %vm218, %v679, 0.0
    %682 = vadd.xlane.f32.xlu0 %v681
    %v683 = vpop.xlane.xlu0 %682
    %v684 = vsel %vm218, %v680, 0.0
    %685 = vadd.xlane.f32.xlu0 %v684
    %v686 = vpop.xlane.xlu0 %685
    %v687 = vmul.f32 %v683, %v674
    %v688 = vmul.f32 %v686, %v674
    %v689 = vadd.f32 %v687, 1e-05
    %v690 = vadd.f32 %v688, 1e-05
    %v691 = vrsqrt.pop %v689
    %v692 = vrsqrt.pop %v690
    %v693 = vmul.f32 %v677, %v691
    %v694 = vmul.f32 %v678, %v692
    %v695 = vlaneseq
    %v696 = vshrl.u32 %v695, 7
    %v697 = vsub.s32 0, %v696
    %v698 = vrot.slane %v667, %v697
    %v699 = vmul.f32 %v693, %v698
    %v700 = vmul.f32 %v694, %v698
    %702 = vrot.lane.b32.xlu0 %v698, 112
    %v703 = vpop.permute.xlu0 %702
    %v705 = vadd.f32 %v699, %v703
    %v706 = vadd.f32 %v700, %v703
    %v707 = vld [vmem:[#allocation2 + $0x28] sm:$0xff]
    %v708 = vld [vmem:[#allocation2 + $0x30] sm:$0xff]
    %709 = vrot.lane.b32.xlu0 %v217, 64
    %v710 = vpop.permute.xlu0 %709
    %v713 = vsel %vm218, %v705, 0
    %v716 = vsel %vm218, %v706, 0
    %718 = vmatprep.subr.mxu0 0.0
    %719 = vmatpush1.msra.mxu0 %v707
    %720 = vmatprep.subr.mxu0 0.0
    %721 = vmatpush1.msra.mxu0 %v708
    %722 = vmatprep.subr.mxu0 0.0
    %723 = vmatpush1.msra.mxu0 0.0
    %724 = vmatprep.subr.mxu0 0.0
    %725 = vmatpush1.msra.mxu0 0.0
    %726 = vmatprep.subr.mxu0 0.0
    %727 = vmatpush1.msra.mxu0 0.0
    %728 = vmatprep.subr.mxu0 0.0
    %729 = vmatpush1.msra.mxu0 0.0
    %730 = vmatprep.subr.mxu0 0.0
    %731 = vmatpush1.msra.mxu0 0.0
    %732 = vmatprep.subr.mxu0 0.0
    %733 = vmatpush1.msra.mxu0 0.0
    %734 = vmatprep.subr.mxu0 0.0
    %735 = vmatpush1.msra.mxu0 0.0
    %736 = vmatprep.subr.mxu0 0.0
    %737 = vmatpush1.msra.mxu0 0.0
    %738 = vmatprep.subr.mxu0 0.0
    %739 = vmatpush1.msra.mxu0 0.0
    %740 = vmatprep.subr.mxu0 0.0
    %741 = vmatpush1.msra.mxu0 0.0
    %742 = vmatprep.subr.mxu0 0.0
    %743 = vmatpush1.msra.mxu0 0.0
    %744 = vmatprep.subr.mxu0 0.0
    %745 = vmatpush1.msra.mxu0 0.0
    %746 = vmatprep.subr.mxu0 0.0
    %747 = vmatpush1.msra.mxu0 0.0
    %748 = vmatprep.subr.mxu0 0.0
    %749 = vmatpush1.msra.mxu0 0.0
    %750 = vmatprep.subr.mxu0 0.0
    %751 = vmatpush1.msra.mxu0 0.0
    %752 = vmatprep.subr.mxu0 0.0
    %753 = vmatpush1.msra.mxu0 0.0
    %754 = vmatprep.subr.mxu0 0.0
    %755 = vmatpush1.msra.mxu0 0.0
    %756 = vmatprep.subr.mxu0 0.0
    %757 = vmatpush1.msra.mxu0 0.0
    %758 = vmatprep.subr.mxu0 0.0
    %759 = vmatpush1.msra.mxu0 0.0
    %760 = vmatprep.subr.mxu0 0.0
    %761 = vmatpush1.msra.mxu0 0.0
    %762 = vmatprep.subr.mxu0 0.0
    %763 = vmatpush1.msra.mxu0 0.0
    %764 = vmatprep.subr.mxu0 0.0
    %765 = vmatpush1.msra.mxu0 0.0
    %766 = vmatprep.subr.mxu0 0.0
    %767 = vmatpush1.msra.mxu0 0.0
    %768 = vmatprep.subr.mxu0 0.0
    %769 = vmatpush1.msra.mxu0 0.0
    %770 = vmatprep.subr.mxu0 0.0
    %771 = vmatpush1.msra.mxu0 0.0
    %772 = vmatprep.subr.mxu0 0.0
    %773 = vmatpush1.msra.mxu0 0.0
    %774 = vmatprep.subr.mxu0 0.0
    %775 = vmatpush1.msra.mxu0 0.0
    %776 = vmatprep.subr.mxu0 0.0
    %777 = vmatpush1.msra.mxu0 0.0
    %778 = vmatprep.subr.mxu0 0.0
    %779 = vmatpush1.msra.mxu0 0.0
    %780 = vmatprep.subr.mxu0 0.0
    %781 = vmatpush1.msra.mxu0 0.0
    %782 = vmatprep.mubr.f32.mxu0 0.0
    %783 = vmatmul.mubr.f32.gmra.mrb[0].mxu0 %v713
    %v784 = vpop.f32.mrb[0].mxu0
    %v785 = vadd.f32 %v710, %v784
    %v786 = vpop.f32.mrb[0].mxu0
    %787 = vmatprep.mubr.f32.mxu0 0.0
    %788 = vmatmul.mubr.f32.gmra.mrb[0].mxu0 %v716
    %v789 = vpop.f32.mrb[0].mxu0
    %v790 = vadd.f32 %v710, %v789
    %v791 = vpop.f32.mrb[0].mxu0
    %792 = vdwg.mxu0
    %v793 = vmax.f32 %v785, 0.0
    %v794 = vmax.f32 %v790, 0.0
    %v795 = vld [vmem:[#allocation2 + $0x38] sm:$0xff]
    %v796 = vld [vmem:[#allocation2 + $0x40] sm:$0xff]
    %v797 = vld [vmem:[#allocation2 + $0x48] sm:$0xff]
    %v798 = vld [vmem:[#allocation2 + $0x50] sm:$0xff]
    %799 = vrot.lane.b32.xlu0 %v217, 32
    %v800 = vpop.permute.xlu0 %799
    %vm802 = vcmask 261120
    %v804 = vsel %vm802, %v793, 0
    %v807 = vsel %vm802, %v794, 0
    %809 = vmatprep.subr.mxu0 0.0
    %810 = vmatpush1.msra.mxu0 %v795
    %811 = vmatprep.subr.mxu0 0.0
    %812 = vmatpush1.msra.mxu0 %v796
    %813 = vmatprep.subr.mxu0 0.0
    %814 = vmatpush1.msra.mxu0 %v797
    %815 = vmatprep.subr.mxu0 0.0
    %816 = vmatpush1.msra.mxu0 %v798
    %817 = vmatprep.subr.mxu0 0.0
    %818 = vmatpush1.msra.mxu0 0.0
    %819 = vmatprep.subr.mxu0 0.0
    %820 = vmatpush1.msra.mxu0 0.0
    %821 = vmatprep.subr.mxu0 0.0
    %822 = vmatpush1.msra.mxu0 0.0
    %823 = vmatprep.subr.mxu0 0.0
    %824 = vmatpush1.msra.mxu0 0.0
    %825 = vmatprep.subr.mxu0 0.0
    %826 = vmatpush1.msra.mxu0 0.0
    %827 = vmatprep.subr.mxu0 0.0
    %828 = vmatpush1.msra.mxu0 0.0
    %829 = vmatprep.subr.mxu0 0.0
    %830 = vmatpush1.msra.mxu0 0.0
    %831 = vmatprep.subr.mxu0 0.0
    %832 = vmatpush1.msra.mxu0 0.0
    %833 = vmatprep.subr.mxu0 0.0
    %834 = vmatpush1.msra.mxu0 0.0
    %835 = vmatprep.subr.mxu0 0.0
    %836 = vmatpush1.msra.mxu0 0.0
    %837 = vmatprep.subr.mxu0 0.0
    %838 = vmatpush1.msra.mxu0 0.0
    %839 = vmatprep.subr.mxu0 0.0
    %840 = vmatpush1.msra.mxu0 0.0
    %841 = vmatprep.subr.mxu0 0.0
    %842 = vmatpush1.msra.mxu0 0.0
    %843 = vmatprep.subr.mxu0 0.0
    %844 = vmatpush1.msra.mxu0 0.0
    %845 = vmatprep.subr.mxu0 0.0
    %846 = vmatpush1.msra.mxu0 0.0
    %847 = vmatprep.subr.mxu0 0.0
    %848 = vmatpush1.msra.mxu0 0.0
    %849 = vmatprep.subr.mxu0 0.0
    %850 = vmatpush1.msra.mxu0 0.0
    %851 = vmatprep.subr.mxu0 0.0
    %852 = vmatpush1.msra.mxu0 0.0
    %853 = vmatprep.subr.mxu0 0.0
    %854 = vmatpush1.msra.mxu0 0.0
    %855 = vmatprep.subr.mxu0 0.0
    %856 = vmatpush1.msra.mxu0 0.0
    %857 = vmatprep.subr.mxu0 0.0
    %858 = vmatpush1.msra.mxu0 0.0
    %859 = vmatprep.subr.mxu0 0.0
    %860 = vmatpush1.msra.mxu0 0.0
    %861 = vmatprep.subr.mxu0 0.0
    %862 = vmatpush1.msra.mxu0 0.0
    %863 = vmatprep.subr.mxu0 0.0
    %864 = vmatpush1.msra.mxu0 0.0
    %865 = vmatprep.subr.mxu0 0.0
    %866 = vmatpush1.msra.mxu0 0.0
    %867 = vmatprep.subr.mxu0 0.0
    %868 = vmatpush1.msra.mxu0 0.0
    %869 = vmatprep.subr.mxu0 0.0
    %870 = vmatpush1.msra.mxu0 0.0
    %871 = vmatprep.subr.mxu0 0.0
    %872 = vmatpush1.msra.mxu0 0.0
    %873 = vmatprep.mubr.f32.mxu0 0.0
    %874 = vmatmul.mubr.f32.gmra.mrb[0].mxu0 %v804
    %v875 = vpop.f32.mrb[0].mxu0
    %v876 = vadd.f32 %v800, %v875
    %v877 = vpop.f32.mrb[0].mxu0
    %878 = vmatprep.mubr.f32.mxu0 0.0
    %879 = vmatmul.mubr.f32.gmra.mrb[0].mxu0 %v807
    %v880 = vpop.f32.mrb[0].mxu0
    %v881 = vadd.f32 %v800, %v880
    %v882 = vpop.f32.mrb[0].mxu0
    %883 = vdwg.mxu0
    %v884 = vadd.f32 %v705, %v876
    %v885 = vadd.f32 %v706, %v881
    %v886 = vsel %vm218, %v884, 0.0
    %887 = vadd.xlane.f32.xlu0 %v886
    %v888 = vpop.xlane.xlu0 %887
    %v889 = vsel %vm218, %v885, 0.0
    %890 = vadd.xlane.f32.xlu0 %v889
    %v891 = vpop.xlane.xlu0 %890
    %v892 = vmul.f32 %v888, %v674
    %v893 = vmul.f32 %v891, %v674
    %v894 = vsub.f32 %v884, %v892
    %v895 = vsub.f32 %v885, %v893
    %v896 = vmul.f32 %v894, %v894
    %v897 = vmul.f32 %v895, %v895
    %v898 = vsel %vm218, %v896, 0.0
    %899 = vadd.xlane.f32.xlu0 %v898
    %v900 = vpop.xlane.xlu0 %899
    %v901 = vsel %vm218, %v897, 0.0
    %902 = vadd.xlane.f32.xlu0 %v901
    %v903 = vpop.xlane.xlu0 %902
    %v904 = vmul.f32 %v900, %v674
    %v905 = vmul.f32 %v903, %v674
    %v906 = vadd.f32 %v904, 1e-05
    %v907 = vadd.f32 %v905, 1e-05
    %v908 = vrsqrt.pop %v906
    %v909 = vrsqrt.pop %v907
    %v910 = vmul.f32 %v894, %v908
    %v911 = vmul.f32 %v895, %v909
    %912 = vrot.lane.b32.xlu0 %v698, 96
    %v913 = vpop.permute.xlu0 %912
    %v915 = vmul.f32 %v910, %v913
    %v916 = vmul.f32 %v911, %v913
    %917 = vrot.lane.b32.xlu0 %v698, 80
    %v918 = vpop.permute.xlu0 %917
    %v920 = vadd.f32 %v915, %v918
    %v921 = vadd.f32 %v916, %v918
    %v922 = vld [vmem:[#allocation2 + $0x3] sm:$0x1]
    %v923 = vlaneseq
    %v924 = vshrl.u32 %v923, 7
    %v925 = vsub.s32 0, %v924
    %v926 = vrot.slane %v922, %v925
    %927 = vrot.lane.b32.xlu0 %v211, 80
    %v928 = vpop.permute.xlu0 %927
    %929 = vrot.lane.b32.xlu0 %v212, 80
    %v930 = vpop.permute.xlu0 %929
    %v934 = vsel %vm218, %v920, 0
    %v937 = vsel %vm218, %v921, 0
    %939 = vmatprep.subr.mxu0 0.0
    %940 = vmatpush1.msra.mxu0 %v928
    %941 = vmatprep.subr.mxu0 0.0
    %942 = vmatpush1.msra.mxu0 %v930
    %943 = vmatprep.subr.mxu0 0.0
    %944 = vmatpush1.msra.mxu0 0.0
    %945 = vmatprep.subr.mxu0 0.0
    %946 = vmatpush1.msra.mxu0 0.0
    %947 = vmatprep.subr.mxu0 0.0
    %948 = vmatpush1.msra.mxu0 0.0
    %949 = vmatprep.subr.mxu0 0.0
    %950 = vmatpush1.msra.mxu0 0.0
    %951 = vmatprep.subr.mxu0 0.0
    %952 = vmatpush1.msra.mxu0 0.0
    %953 = vmatprep.subr.mxu0 0.0
    %954 = vmatpush1.msra.mxu0 0.0
    %955 = vmatprep.subr.mxu0 0.0
    %956 = vmatpush1.msra.mxu0 0.0
    %957 = vmatprep.subr.mxu0 0.0
    %958 = vmatpush1.msra.mxu0 0.0
    %959 = vmatprep.subr.mxu0 0.0
    %960 = vmatpush1.msra.mxu0 0.0
    %961 = vmatprep.subr.mxu0 0.0
    %962 = vmatpush1.msra.mxu0 0.0
    %963 = vmatprep.subr.mxu0 0.0
    %964 = vmatpush1.msra.mxu0 0.0
    %965 = vmatprep.subr.mxu0 0.0
    %966 = vmatpush1.msra.mxu0 0.0
    %967 = vmatprep.subr.mxu0 0.0
    %968 = vmatpush1.msra.mxu0 0.0
    %969 = vmatprep.subr.mxu0 0.0
    %970 = vmatpush1.msra.mxu0 0.0
    %971 = vmatprep.subr.mxu0 0.0
    %972 = vmatpush1.msra.mxu0 0.0
    %973 = vmatprep.subr.mxu0 0.0
    %974 = vmatpush1.msra.mxu0 0.0
    %975 = vmatprep.subr.mxu0 0.0
    %976 = vmatpush1.msra.mxu0 0.0
    %977 = vmatprep.subr.mxu0 0.0
    %978 = vmatpush1.msra.mxu0 0.0
    %979 = vmatprep.subr.mxu0 0.0
    %980 = vmatpush1.msra.mxu0 0.0
    %981 = vmatprep.subr.mxu0 0.0
    %982 = vmatpush1.msra.mxu0 0.0
    %983 = vmatprep.subr.mxu0 0.0
    %984 = vmatpush1.msra.mxu0 0.0
    %985 = vmatprep.subr.mxu0 0.0
    %986 = vmatpush1.msra.mxu0 0.0
    %987 = vmatprep.subr.mxu0 0.0
    %988 = vmatpush1.msra.mxu0 0.0
    %989 = vmatprep.subr.mxu0 0.0
    %990 = vmatpush1.msra.mxu0 0.0
    %991 = vmatprep.subr.mxu0 0.0
    %992 = vmatpush1.msra.mxu0 0.0
    %993 = vmatprep.subr.mxu0 0.0
    %994 = vmatpush1.msra.mxu0 0.0
    %995 = vmatprep.subr.mxu0 0.0
    %996 = vmatpush1.msra.mxu0 0.0
    %997 = vmatprep.subr.mxu0 0.0
    %998 = vmatpush1.msra.mxu0 0.0
    %999 = vmatprep.subr.mxu0 0.0
    %1000 = vmatpush1.msra.mxu0 0.0
    %1001 = vmatprep.subr.mxu0 0.0
    %1002 = vmatpush1.msra.mxu0 0.0
    %1003 = vmatprep.mubr.f32.mxu0 0.0
    %1004 = vmatmul.mubr.f32.gmra.mrb[0].mxu0 %v934
    %v1005 = vpop.f32.mrb[0].mxu0
    %v1006 = vadd.f32 %v926, %v1005
    %v1007 = vpop.f32.mrb[0].mxu0
    %1008 = vmatprep.mubr.f32.mxu0 0.0
    %1009 = vmatmul.mubr.f32.gmra.mrb[0].mxu0 %v937
    %v1010 = vpop.f32.mrb[0].mxu0
    %v1011 = vadd.f32 %v926, %v1010
    %v1012 = vpop.f32.mrb[0].mxu0
    %1013 = vdwg.mxu0
    %v1014 = vmul.f32 %v1006, %v205
    %v1015 = vmul.f32 %v1011, %v205
    %v1016 = vmul.f32 %v1006, %v210
    %v1017 = vmul.f32 %v1011, %v210
    %1020 = vrot.lane.b32.xlu0 %v1006, 112
    %v1021 = vpop.permute.xlu0 %1020
    %1022 = vrot.lane.b32.xlu0 %v1011, 112
    %v1023 = vpop.permute.xlu0 %1022
    %v1025 = vsel %vm218, %v1014, 0
    %v1028 = vsel %vm218, %v1015, 0
    %v1031 = vsel %vm218, %v1016, 0
    %v1034 = vsel %vm218, %v1017, 0
    %v1036 = vsel %vm218, %v1021, 0
    %v1038 = vsel %vm218, %v1023, 0
    %1040 = vmatprep.subr.mxu0 0.0
    %1041 = vmatpush1.xpose.msra.mxu0 %v1036
    %1042 = vmatprep.subr.mxu0 0.0
    %1043 = vmatpush1.xpose.msra.mxu0 %v1038
    %1044 = vmatprep.subr.mxu0 0.0
    %1045 = vmatpush1.xpose.msra.mxu0 0.0
    %1046 = vmatprep.subr.mxu0 0.0
    %1047 = vmatpush1.xpose.msra.mxu0 0.0
    %1048 = vmatprep.subr.mxu0 0.0
    %1049 = vmatpush1.xpose.msra.mxu0 0.0
    %1050 = vmatprep.subr.mxu0 0.0
    %1051 = vmatpush1.xpose.msra.mxu0 0.0
    %1052 = vmatprep.subr.mxu0 0.0
    %1053 = vmatpush1.xpose.msra.mxu0 0.0
    %1054 = vmatprep.subr.mxu0 0.0
    %1055 = vmatpush1.xpose.msra.mxu0 0.0
    %1056 = vmatprep.subr.mxu0 0.0
    %1057 = vmatpush1.xpose.msra.mxu0 0.0
    %1058 = vmatprep.subr.mxu0 0.0
    %1059 = vmatpush1.xpose.msra.mxu0 0.0
    %1060 = vmatprep.subr.mxu0 0.0
    %1061 = vmatpush1.xpose.msra.mxu0 0.0
    %1062 = vmatprep.subr.mxu0 0.0
    %1063 = vmatpush1.xpose.msra.mxu0 0.0
    %1064 = vmatprep.subr.mxu0 0.0
    %1065 = vmatpush1.xpose.msra.mxu0 0.0
    %1066 = vmatprep.subr.mxu0 0.0
    %1067 = vmatpush1.xpose.msra.mxu0 0.0
    %1068 = vmatprep.subr.mxu0 0.0
    %1069 = vmatpush1.xpose.msra.mxu0 0.0
    %1070 = vmatprep.subr.mxu0 0.0
    %1071 = vmatpush1.xpose.msra.mxu0 0.0
    %1072 = vmatprep.subr.mxu0 0.0
    %1073 = vmatpush1.xpose.msra.mxu0 0.0
    %1074 = vmatprep.subr.mxu0 0.0
    %1075 = vmatpush1.xpose.msra.mxu0 0.0
    %1076 = vmatprep.subr.mxu0 0.0
    %1077 = vmatpush1.xpose.msra.mxu0 0.0
    %1078 = vmatprep.subr.mxu0 0.0
    %1079 = vmatpush1.xpose.msra.mxu0 0.0
    %1080 = vmatprep.subr.mxu0 0.0
    %1081 = vmatpush1.xpose.msra.mxu0 0.0
    %1082 = vmatprep.subr.mxu0 0.0
    %1083 = vmatpush1.xpose.msra.mxu0 0.0
    %1084 = vmatprep.subr.mxu0 0.0
    %1085 = vmatpush1.xpose.msra.mxu0 0.0
    %1086 = vmatprep.subr.mxu0 0.0
    %1087 = vmatpush1.xpose.msra.mxu0 0.0
    %1088 = vmatprep.subr.mxu0 0.0
    %1089 = vmatpush1.xpose.msra.mxu0 0.0
    %1090 = vmatprep.subr.mxu0 0.0
    %1091 = vmatpush1.xpose.msra.mxu0 0.0
    %1092 = vmatprep.subr.mxu0 0.0
    %1093 = vmatpush1.xpose.msra.mxu0 0.0
    %1094 = vmatprep.subr.mxu0 0.0
    %1095 = vmatpush1.xpose.msra.mxu0 0.0
    %1096 = vmatprep.subr.mxu0 0.0
    %1097 = vmatpush1.xpose.msra.mxu0 0.0
    %1098 = vmatprep.subr.mxu0 0.0
    %1099 = vmatpush1.xpose.msra.mxu0 0.0
    %1100 = vmatprep.subr.mxu0 0.0
    %1101 = vmatpush1.xpose.msra.mxu0 0.0
    %1102 = vmatprep.subr.mxu0 0.0
    %1103 = vmatpush1.xpose.msra.mxu0 0.0
    %1104 = vmatprep.mubr.f32.mxu0 0.0
    %1105 = vmatmul.mubr.f32.gmra.mrb[0].mxu0 %v1025
    %v1106 = vpop.f32.mrb[0].mxu0
    %v1107 = vadd.f32 0.0, %v1106
    %v1108 = vpop.f32.mrb[0].mxu0
    %1109 = vmatprep.mubr.f32.mxu0 0.0
    %1110 = vmatmul.mubr.f32.gmra.mrb[0].mxu0 %v1028
    %v1111 = vpop.f32.mrb[0].mxu0
    %v1112 = vadd.f32 0.0, %v1111
    %v1113 = vpop.f32.mrb[0].mxu0
    %1114 = vmatprep.mubr.f32.mxu0 0.0
    %1115 = vmatmul.mubr.f32.gmra.mrb[0].mxu0 %v1031
    %v1116 = vpop.f32.mrb[0].mxu0
    %v1117 = vadd.f32 0.0, %v1116
    %v1118 = vpop.f32.mrb[0].mxu0
    %1119 = vmatprep.mubr.f32.mxu0 0.0
    %1120 = vmatmul.mubr.f32.gmra.mrb[0].mxu0 %v1034
    %v1121 = vpop.f32.mrb[0].mxu0
    %v1122 = vadd.f32 0.0, %v1121
    %v1123 = vpop.f32.mrb[0].mxu0
    %1124 = vdwg.mxu0
    %v1125 = vmul.f32 %v1107, 0.35355338
    %v1126 = vmul.f32 %v1112, 0.35355338
    %v1127 = vmul.f32 %v1117, 0.35355338
    %v1128 = vmul.f32 %v1122, 0.35355338
    %v1129 = vadd.f32 %v1125, %v197
    %v1130 = vadd.f32 %v1126, %v198
    %v1131 = vadd.f32 %v1127, %v199
    %v1132 = vadd.f32 %v1128, %v200
    %v1133 = vsel %vm218, %v1129, -inf
    %1134 = vmax.xlane.f32.xlu0 %v1133
    %v1135 = vpop.xlane.xlu0 %1134
    %v1136 = vsel %vm218, %v1130, -inf
    %1137 = vmax.xlane.f32.xlu0 %v1136
    %v1138 = vpop.xlane.xlu0 %1137
    %v1139 = vsel %vm218, %v1131, -inf
    %1140 = vmax.xlane.f32.xlu0 %v1139
    %v1141 = vpop.xlane.xlu0 %1140
    %v1142 = vsel %vm218, %v1132, -inf
    %1143 = vmax.xlane.f32.xlu0 %v1142
    %v1144 = vpop.xlane.xlu0 %1143
    %v1145 = vsub.f32 %v1129, %v1135
    %v1146 = vsub.f32 %v1130, %v1138
    %v1147 = vsub.f32 %v1131, %v1141
    %v1148 = vsub.f32 %v1132, %v1144
    %v1149 = vmul.f32 %v1145, 1.442695
    %v1150 = vpow.pop %v1149
    %v1151 = vmul.f32 %v1146, 1.442695
    %v1152 = vpow.pop %v1151
    %v1153 = vmul.f32 %v1147, 1.442695
    %v1154 = vpow.pop %v1153
    %v1155 = vmul.f32 %v1148, 1.442695
    %v1156 = vpow.pop %v1155
    %v1157 = vsel %vm218, %v1150, 0.0
    %1158 = vadd.xlane.f32.xlu0 %v1157
    %v1159 = vpop.xlane.xlu0 %1158
    %v1160 = vsel %vm218, %v1152, 0.0
    %1161 = vadd.xlane.f32.xlu0 %v1160
    %v1162 = vpop.xlane.xlu0 %1161
    %v1163 = vsel %vm218, %v1154, 0.0
    %1164 = vadd.xlane.f32.xlu0 %v1163
    %v1165 = vpop.xlane.xlu0 %1164
    %v1166 = vsel %vm218, %v1156, 0.0
    %1167 = vadd.xlane.f32.xlu0 %v1166
    %v1168 = vpop.xlane.xlu0 %1167
    %v1169 = vrcp.pop %v1159
    %v1170 = vrcp.pop %v1162
    %v1171 = vrcp.pop %v1165
    %v1172 = vrcp.pop %v1168
    %v1173 = vmul.f32 %v1150, %v1169
    %v1174 = vmul.f32 %v1152, %v1170
    %v1175 = vmul.f32 %v1154, %v1171
    %v1176 = vmul.f32 %v1156, %v1172
    %1177 = vrot.lane.b32.xlu0 %v1006, 96
    %v1178 = vpop.permute.xlu0 %1177
    %1179 = vrot.lane.b32.xlu0 %v1011, 96
    %v1180 = vpop.permute.xlu0 %1179
    %v1184 = vsel %vm218, %v1173, 0
    %v1187 = vsel %vm218, %v1174, 0
    %v1190 = vsel %vm218, %v1175, 0
    %v1193 = vsel %vm218, %v1176, 0
    %1195 = vmatprep.subr.mxu0 0.0
    %1196 = vmatpush1.msra.mxu0 %v1178
    %1197 = vmatprep.subr.mxu0 0.0
    %1198 = vmatpush1.msra.mxu0 %v1180
    %1199 = vmatprep.subr.mxu0 0.0
    %1200 = vmatpush1.msra.mxu0 0.0
    %1201 = vmatprep.subr.mxu0 0.0
    %1202 = vmatpush1.msra.mxu0 0.0
    %1203 = vmatprep.subr.mxu0 0.0
    %1204 = vmatpush1.msra.mxu0 0.0
    %1205 = vmatprep.subr.mxu0 0.0
    %1206 = vmatpush1.msra.mxu0 0.0
    %1207 = vmatprep.subr.mxu0 0.0
    %1208 = vmatpush1.msra.mxu0 0.0
    %1209 = vmatprep.subr.mxu0 0.0
    %1210 = vmatpush1.msra.mxu0 0.0
    %1211 = vmatprep.subr.mxu0 0.0
    %1212 = vmatpush1.msra.mxu0 0.0
    %1213 = vmatprep.subr.mxu0 0.0
    %1214 = vmatpush1.msra.mxu0 0.0
    %1215 = vmatprep.subr.mxu0 0.0
    %1216 = vmatpush1.msra.mxu0 0.0
    %1217 = vmatprep.subr.mxu0 0.0
    %1218 = vmatpush1.msra.mxu0 0.0
    %1219 = vmatprep.subr.mxu0 0.0
    %1220 = vmatpush1.msra.mxu0 0.0
    %1221 = vmatprep.subr.mxu0 0.0
    %1222 = vmatpush1.msra.mxu0 0.0
    %1223 = vmatprep.subr.mxu0 0.0
    %1224 = vmatpush1.msra.mxu0 0.0
    %1225 = vmatprep.subr.mxu0 0.0
    %1226 = vmatpush1.msra.mxu0 0.0
    %1227 = vmatprep.subr.mxu0 0.0
    %1228 = vmatpush1.msra.mxu0 0.0
    %1229 = vmatprep.subr.mxu0 0.0
    %1230 = vmatpush1.msra.mxu0 0.0
    %1231 = vmatprep.subr.mxu0 0.0
    %1232 = vmatpush1.msra.mxu0 0.0
    %1233 = vmatprep.subr.mxu0 0.0
    %1234 = vmatpush1.msra.mxu0 0.0
    %1235 = vmatprep.subr.mxu0 0.0
    %1236 = vmatpush1.msra.mxu0 0.0
    %1237 = vmatprep.subr.mxu0 0.0
    %1238 = vmatpush1.msra.mxu0 0.0
    %1239 = vmatprep.subr.mxu0 0.0
    %1240 = vmatpush1.msra.mxu0 0.0
    %1241 = vmatprep.subr.mxu0 0.0
    %1242 = vmatpush1.msra.mxu0 0.0
    %1243 = vmatprep.subr.mxu0 0.0
    %1244 = vmatpush1.msra.mxu0 0.0
    %1245 = vmatprep.subr.mxu0 0.0
    %1246 = vmatpush1.msra.mxu0 0.0
    %1247 = vmatprep.subr.mxu0 0.0
    %1248 = vmatpush1.msra.mxu0 0.0
    %1249 = vmatprep.subr.mxu0 0.0
    %1250 = vmatpush1.msra.mxu0 0.0
    %1251 = vmatprep.subr.mxu0 0.0
    %1252 = vmatpush1.msra.mxu0 0.0
    %1253 = vmatprep.subr.mxu0 0.0
    %1254 = vmatpush1.msra.mxu0 0.0
    %1255 = vmatprep.subr.mxu0 0.0
    %1256 = vmatpush1.msra.mxu0 0.0
    %1257 = vmatprep.subr.mxu0 0.0
    %1258 = vmatpush1.msra.mxu0 0.0
    %1259 = vmatprep.mubr.f32.mxu0 0.0
    %1260 = vmatmul.mubr.f32.gmra.mrb[0].mxu0 %v1184
    %v1261 = vpop.f32.mrb[0].mxu0
    %v1262 = vadd.f32 0.0, %v1261
    %v1263 = vpop.f32.mrb[0].mxu0
    %1264 = vmatprep.mubr.f32.mxu0 0.0
    %1265 = vmatmul.mubr.f32.gmra.mrb[0].mxu0 %v1187
    %v1266 = vpop.f32.mrb[0].mxu0
    %v1267 = vadd.f32 0.0, %v1266
    %v1268 = vpop.f32.mrb[0].mxu0
    %1269 = vmatprep.mubr.f32.mxu0 0.0
    %1270 = vmatmul.mubr.f32.gmra.mrb[0].mxu0 %v1190
    %v1271 = vpop.f32.mrb[0].mxu0
    %v1272 = vadd.f32 0.0, %v1271
    %v1273 = vpop.f32.mrb[0].mxu0
    %1274 = vmatprep.mubr.f32.mxu0 0.0
    %1275 = vmatmul.mubr.f32.gmra.mrb[0].mxu0 %v1193
    %v1276 = vpop.f32.mrb[0].mxu0
    %v1277 = vadd.f32 0.0, %v1276
    %v1278 = vpop.f32.mrb[0].mxu0
    %1279 = vdwg.mxu0
    %v1280 = vmul.f32 %v1262, %v205
    %v1281 = vmul.f32 %v1267, %v205
    %v1282 = vmul.f32 %v1272, %v210
    %v1283 = vmul.f32 %v1277, %v210
    %v1284 = vadd.f32 %v1280, %v1282
    %v1285 = vadd.f32 %v1281, %v1283
    %1286 = vrot.lane.b32.xlu0 %v211, 16
    %v1287 = vpop.permute.xlu0 %1286
    %1288 = vrot.lane.b32.xlu0 %v212, 16
    %v1289 = vpop.permute.xlu0 %1288
    %1293 = vrot.lane.b32.xlu0 %v926, 80
    %v1294 = vpop.permute.xlu0 %1293
    %v1297 = vsel %vm218, %v1284, 0
    %v1300 = vsel %vm218, %v1285, 0
    %1302 = vmatprep.subr.mxu0 0.0
    %1303 = vmatpush1.msra.mxu0 %v1287
    %1304 = vmatprep.subr.mxu0 0.0
    %1305 = vmatpush1.msra.mxu0 %v1289
    %1306 = vmatprep.subr.mxu0 0.0
    %1307 = vmatpush1.msra.mxu0 0.0
    %1308 = vmatprep.subr.mxu0 0.0
    %1309 = vmatpush1.msra.mxu0 0.0
    %1310 = vmatprep.subr.mxu0 0.0
    %1311 = vmatpush1.msra.mxu0 0.0
    %1312 = vmatprep.subr.mxu0 0.0
    %1313 = vmatpush1.msra.mxu0 0.0
    %1314 = vmatprep.subr.mxu0 0.0
    %1315 = vmatpush1.msra.mxu0 0.0
    %1316 = vmatprep.subr.mxu0 0.0
    %1317 = vmatpush1.msra.mxu0 0.0
    %1318 = vmatprep.subr.mxu0 0.0
    %1319 = vmatpush1.msra.mxu0 0.0
    %1320 = vmatprep.subr.mxu0 0.0
    %1321 = vmatpush1.msra.mxu0 0.0
    %1322 = vmatprep.subr.mxu0 0.0
    %1323 = vmatpush1.msra.mxu0 0.0
    %1324 = vmatprep.subr.mxu0 0.0
    %1325 = vmatpush1.msra.mxu0 0.0
    %1326 = vmatprep.subr.mxu0 0.0
    %1327 = vmatpush1.msra.mxu0 0.0
    %1328 = vmatprep.subr.mxu0 0.0
    %1329 = vmatpush1.msra.mxu0 0.0
    %1330 = vmatprep.subr.mxu0 0.0
    %1331 = vmatpush1.msra.mxu0 0.0
    %1332 = vmatprep.subr.mxu0 0.0
    %1333 = vmatpush1.msra.mxu0 0.0
    %1334 = vmatprep.subr.mxu0 0.0
    %1335 = vmatpush1.msra.mxu0 0.0
    %1336 = vmatprep.subr.mxu0 0.0
    %1337 = vmatpush1.msra.mxu0 0.0
    %1338 = vmatprep.subr.mxu0 0.0
    %1339 = vmatpush1.msra.mxu0 0.0
    %1340 = vmatprep.subr.mxu0 0.0
    %1341 = vmatpush1.msra.mxu0 0.0
    %1342 = vmatprep.subr.mxu0 0.0
    %1343 = vmatpush1.msra.mxu0 0.0
    %1344 = vmatprep.subr.mxu0 0.0
    %1345 = vmatpush1.msra.mxu0 0.0
    %1346 = vmatprep.subr.mxu0 0.0
    %1347 = vmatpush1.msra.mxu0 0.0
    %1348 = vmatprep.subr.mxu0 0.0
    %1349 = vmatpush1.msra.mxu0 0.0
    %1350 = vmatprep.subr.mxu0 0.0
    %1351 = vmatpush1.msra.mxu0 0.0
    %1352 = vmatprep.subr.mxu0 0.0
    %1353 = vmatpush1.msra.mxu0 0.0
    %1354 = vmatprep.subr.mxu0 0.0
    %1355 = vmatpush1.msra.mxu0 0.0
    %1356 = vmatprep.subr.mxu0 0.0
    %1357 = vmatpush1.msra.mxu0 0.0
    %1358 = vmatprep.subr.mxu0 0.0
    %1359 = vmatpush1.msra.mxu0 0.0
    %1360 = vmatprep.subr.mxu0 0.0
    %1361 = vmatpush1.msra.mxu0 0.0
    %1362 = vmatprep.subr.mxu0 0.0
    %1363 = vmatpush1.msra.mxu0 0.0
    %1364 = vmatprep.subr.mxu0 0.0
    %1365 = vmatpush1.msra.mxu0 0.0
    %1366 = vmatprep.mubr.f32.mxu0 0.0
    %1367 = vmatmul.mubr.f32.gmra.mrb[0].mxu0 %v1297
    %v1368 = vpop.f32.mrb[0].mxu0
    %v1369 = vadd.f32 %v1294, %v1368
    %v1370 = vpop.f32.mrb[0].mxu0
    %1371 = vmatprep.mubr.f32.mxu0 0.0
    %1372 = vmatmul.mubr.f32.gmra.mrb[0].mxu0 %v1300
    %v1373 = vpop.f32.mrb[0].mxu0
    %v1374 = vadd.f32 %v1294, %v1373
    %v1375 = vpop.f32.mrb[0].mxu0
    %1376 = vdwg.mxu0
    %v1377 = vadd.f32 %v920, %v1369
    %v1378 = vadd.f32 %v921, %v1374
    %v1379 = vld [vmem:[#allocation2 + $0x4] sm:$0x1]
    %v1380 = vsel %vm218, %v1377, 0.0
    %1381 = vadd.xlane.f32.xlu0 %v1380
    %v1382 = vpop.xlane.xlu0 %1381
    %v1383 = vsel %vm218, %v1378, 0.0
    %1384 = vadd.xlane.f32.xlu0 %v1383
    %v1385 = vpop.xlane.xlu0 %1384
    %v1386 = vmul.f32 %v1382, %v674
    %v1387 = vmul.f32 %v1385, %v674
    %v1388 = vsub.f32 %v1377, %v1386
    %v1389 = vsub.f32 %v1378, %v1387
    %v1390 = vmul.f32 %v1388, %v1388
    %v1391 = vmul.f32 %v1389, %v1389
    %v1392 = vsel %vm218, %v1390, 0.0
    %1393 = vadd.xlane.f32.xlu0 %v1392
    %v1394 = vpop.xlane.xlu0 %1393
    %v1395 = vsel %vm218, %v1391, 0.0
    %1396 = vadd.xlane.f32.xlu0 %v1395
    %v1397 = vpop.xlane.xlu0 %1396
    %v1398 = vmul.f32 %v1394, %v674
    %v1399 = vmul.f32 %v1397, %v674
    %v1400 = vadd.f32 %v1398, 1e-05
    %v1401 = vadd.f32 %v1399, 1e-05
    %v1402 = vrsqrt.pop %v1400
    %v1403 = vrsqrt.pop %v1401
    %v1404 = vmul.f32 %v1388, %v1402
    %v1405 = vmul.f32 %v1389, %v1403
    %v1406 = vlaneseq
    %v1407 = vshrl.u32 %v1406, 7
    %v1408 = vsub.s32 0, %v1407
    %v1409 = vrot.slane %v1379, %v1408
    %v1410 = vmul.f32 %v1404, %v1409
    %v1411 = vmul.f32 %v1405, %v1409
    %1413 = vrot.lane.b32.xlu0 %v1409, 112
    %v1414 = vpop.permute.xlu0 %1413
    %v1416 = vadd.f32 %v1410, %v1414
    %v1417 = vadd.f32 %v1411, %v1414
    %1420 = vrot.lane.b32.xlu0 %v707, 96
    %v1421 = vpop.permute.xlu0 %1420
    %1422 = vrot.lane.b32.xlu0 %v708, 96
    %v1423 = vpop.permute.xlu0 %1422
    %1426 = vrot.lane.b32.xlu0 %v926, 64
    %v1427 = vpop.permute.xlu0 %1426
    %v1430 = vsel %vm218, %v1416, 0
    %v1433 = vsel %vm218, %v1417, 0
    %1435 = vmatprep.subr.mxu0 0.0
    %1436 = vmatpush1.msra.mxu0 %v1421
    %1437 = vmatprep.subr.mxu0 0.0
    %1438 = vmatpush1.msra.mxu0 %v1423
    %1439 = vmatprep.subr.mxu0 0.0
    %1440 = vmatpush1.msra.mxu0 0.0
    %1441 = vmatprep.subr.mxu0 0.0
    %1442 = vmatpush1.msra.mxu0 0.0
    %1443 = vmatprep.subr.mxu0 0.0
    %1444 = vmatpush1.msra.mxu0 0.0
    %1445 = vmatprep.subr.mxu0 0.0
    %1446 = vmatpush1.msra.mxu0 0.0
    %1447 = vmatprep.subr.mxu0 0.0
    %1448 = vmatpush1.msra.mxu0 0.0
    %1449 = vmatprep.subr.mxu0 0.0
    %1450 = vmatpush1.msra.mxu0 0.0
    %1451 = vmatprep.subr.mxu0 0.0
    %1452 = vmatpush1.msra.mxu0 0.0
    %1453 = vmatprep.subr.mxu0 0.0
    %1454 = vmatpush1.msra.mxu0 0.0
    %1455 = vmatprep.subr.mxu0 0.0
    %1456 = vmatpush1.msra.mxu0 0.0
    %1457 = vmatprep.subr.mxu0 0.0
    %1458 = vmatpush1.msra.mxu0 0.0
    %1459 = vmatprep.subr.mxu0 0.0
    %1460 = vmatpush1.msra.mxu0 0.0
    %1461 = vmatprep.subr.mxu0 0.0
    %1462 = vmatpush1.msra.mxu0 0.0
    %1463 = vmatprep.subr.mxu0 0.0
    %1464 = vmatpush1.msra.mxu0 0.0
    %1465 = vmatprep.subr.mxu0 0.0
    %1466 = vmatpush1.msra.mxu0 0.0
    %1467 = vmatprep.subr.mxu0 0.0
    %1468 = vmatpush1.msra.mxu0 0.0
    %1469 = vmatprep.subr.mxu0 0.0
    %1470 = vmatpush1.msra.mxu0 0.0
    %1471 = vmatprep.subr.mxu0 0.0
    %1472 = vmatpush1.msra.mxu0 0.0
    %1473 = vmatprep.subr.mxu0 0.0
    %1474 = vmatpush1.msra.mxu0 0.0
    %1475 = vmatprep.subr.mxu0 0.0
    %1476 = vmatpush1.msra.mxu0 0.0
    %1477 = vmatprep.subr.mxu0 0.0
    %1478 = vmatpush1.msra.mxu0 0.0
    %1479 = vmatprep.subr.mxu0 0.0
    %1480 = vmatpush1.msra.mxu0 0.0
    %1481 = vmatprep.subr.mxu0 0.0
    %1482 = vmatpush1.msra.mxu0 0.0
    %1483 = vmatprep.subr.mxu0 0.0
    %1484 = vmatpush1.msra.mxu0 0.0
    %1485 = vmatprep.subr.mxu0 0.0
    %1486 = vmatpush1.msra.mxu0 0.0
    %1487 = vmatprep.subr.mxu0 0.0
    %1488 = vmatpush1.msra.mxu0 0.0
    %1489 = vmatprep.subr.mxu0 0.0
    %1490 = vmatpush1.msra.mxu0 0.0
    %1491 = vmatprep.subr.mxu0 0.0
    %1492 = vmatpush1.msra.mxu0 0.0
    %1493 = vmatprep.subr.mxu0 0.0
    %1494 = vmatpush1.msra.mxu0 0.0
    %1495 = vmatprep.subr.mxu0 0.0
    %1496 = vmatpush1.msra.mxu0 0.0
    %1497 = vmatprep.subr.mxu0 0.0
    %1498 = vmatpush1.msra.mxu0 0.0
    %1499 = vmatprep.mubr.f32.mxu0 0.0
    %1500 = vmatmul.mubr.f32.gmra.mrb[0].mxu0 %v1430
    %v1501 = vpop.f32.mrb[0].mxu0
    %v1502 = vadd.f32 %v1427, %v1501
    %v1503 = vpop.f32.mrb[0].mxu0
    %1504 = vmatprep.mubr.f32.mxu0 0.0
    %1505 = vmatmul.mubr.f32.gmra.mrb[0].mxu0 %v1433
    %v1506 = vpop.f32.mrb[0].mxu0
    %v1507 = vadd.f32 %v1427, %v1506
    %v1508 = vpop.f32.mrb[0].mxu0
    %1509 = vdwg.mxu0
    %v1510 = vmax.f32 %v1502, 0.0
    %v1511 = vmax.f32 %v1507, 0.0
    %1516 = vrot.lane.b32.xlu0 %v795, 112
    %v1517 = vpop.permute.xlu0 %1516
    %1518 = vrot.lane.b32.xlu0 %v796, 112
    %v1519 = vpop.permute.xlu0 %1518
    %1520 = vrot.lane.b32.xlu0 %v797, 112
    %v1521 = vpop.permute.xlu0 %1520
    %1522 = vrot.lane.b32.xlu0 %v798, 112
    %v1523 = vpop.permute.xlu0 %1522
    %1528 = vrot.lane.b32.xlu0 %v926, 32
    %v1529 = vpop.permute.xlu0 %1528
    %v1532 = vsel %vm802, %v1510, 0
    %v1535 = vsel %vm802, %v1511, 0
    %1537 = vmatprep.subr.mxu0 0.0
    %1538 = vmatpush1.msra.mxu0 %v1517
    %1539 = vmatprep.subr.mxu0 0.0
    %1540 = vmatpush1.msra.mxu0 %v1519
    %1541 = vmatprep.subr.mxu0 0.0
    %1542 = vmatpush1.msra.mxu0 %v1521
    %1543 = vmatprep.subr.mxu0 0.0
    %1544 = vmatpush1.msra.mxu0 %v1523
    %1545 = vmatprep.subr.mxu0 0.0
    %1546 = vmatpush1.msra.mxu0 0.0
    %1547 = vmatprep.subr.mxu0 0.0
    %1548 = vmatpush1.msra.mxu0 0.0
    %1549 = vmatprep.subr.mxu0 0.0
    %1550 = vmatpush1.msra.mxu0 0.0
    %1551 = vmatprep.subr.mxu0 0.0
    %1552 = vmatpush1.msra.mxu0 0.0
    %1553 = vmatprep.subr.mxu0 0.0
    %1554 = vmatpush1.msra.mxu0 0.0
    %1555 = vmatprep.subr.mxu0 0.0
    %1556 = vmatpush1.msra.mxu0 0.0
    %1557 = vmatprep.subr.mxu0 0.0
    %1558 = vmatpush1.msra.mxu0 0.0
    %1559 = vmatprep.subr.mxu0 0.0
    %1560 = vmatpush1.msra.mxu0 0.0
    %1561 = vmatprep.subr.mxu0 0.0
    %1562 = vmatpush1.msra.mxu0 0.0
    %1563 = vmatprep.subr.mxu0 0.0
    %1564 = vmatpush1.msra.mxu0 0.0
    %1565 = vmatprep.subr.mxu0 0.0
    %1566 = vmatpush1.msra.mxu0 0.0
    %1567 = vmatprep.subr.mxu0 0.0
    %1568 = vmatpush1.msra.mxu0 0.0
    %1569 = vmatprep.subr.mxu0 0.0
    %1570 = vmatpush1.msra.mxu0 0.0
    %1571 = vmatprep.subr.mxu0 0.0
    %1572 = vmatpush1.msra.mxu0 0.0
    %1573 = vmatprep.subr.mxu0 0.0
    %1574 = vmatpush1.msra.mxu0 0.0
    %1575 = vmatprep.subr.mxu0 0.0
    %1576 = vmatpush1.msra.mxu0 0.0
    %1577 = vmatprep.subr.mxu0 0.0
    %1578 = vmatpush1.msra.mxu0 0.0
    %1579 = vmatprep.subr.mxu0 0.0
    %1580 = vmatpush1.msra.mxu0 0.0
    %1581 = vmatprep.subr.mxu0 0.0
    %1582 = vmatpush1.msra.mxu0 0.0
    %1583 = vmatprep.subr.mxu0 0.0
    %1584 = vmatpush1.msra.mxu0 0.0
    %1585 = vmatprep.subr.mxu0 0.0
    %1586 = vmatpush1.msra.mxu0 0.0
    %1587 = vmatprep.subr.mxu0 0.0
    %1588 = vmatpush1.msra.mxu0 0.0
    %1589 = vmatprep.subr.mxu0 0.0
    %1590 = vmatpush1.msra.mxu0 0.0
    %1591 = vmatprep.subr.mxu0 0.0
    %1592 = vmatpush1.msra.mxu0 0.0
    %1593 = vmatprep.subr.mxu0 0.0
    %1594 = vmatpush1.msra.mxu0 0.0
    %1595 = vmatprep.subr.mxu0 0.0
    %1596 = vmatpush1.msra.mxu0 0.0
    %1597 = vmatprep.subr.mxu0 0.0
    %1598 = vmatpush1.msra.mxu0 0.0
    %1599 = vmatprep.subr.mxu0 0.0
    %1600 = vmatpush1.msra.mxu0 0.0
    %1601 = vmatprep.mubr.f32.mxu0 0.0
    %1602 = vmatmul.mubr.f32.gmra.mrb[0].mxu0 %v1532
    %v1603 = vpop.f32.mrb[0].mxu0
    %v1604 = vpop.f32.mrb[0].mxu0
    %1605 = vmatprep.mubr.f32.mxu0 0.0
    %1606 = vmatmul.mubr.f32.gmra.mrb[0].mxu0 %v1535
    %v1607 = vpop.f32.mrb[0].mxu0
    %v1608 = vadd.f32 %v1529, %v1607
    %v1609 = vpop.f32.mrb[0].mxu0
    %1610 = vdwg.mxu0
    %v1611 = vadd.f32 %v1417, %v1608
    %v1612 = vsel %vm218, %v1611, 0.0
    %1613 = vadd.xlane.f32.xlu0 %v1612
    %v1614 = vpop.xlane.xlu0 %1613
    %v1615 = vmul.f32 %v1614, %v674
    %v1616 = vsub.f32 %v1611, %v1615
    %v1617 = vmul.f32 %v1616, %v1616
    %v1618 = vsel %vm218, %v1617, 0.0
    %1619 = vadd.xlane.f32.xlu0 %v1618
    %v1620 = vpop.xlane.xlu0 %1619
    %v1621 = vmul.f32 %v1620, %v674
    %v1622 = vadd.f32 %v1621, 1e-05
    %v1623 = vrsqrt.pop %v1622
    %v1624 = vmul.f32 %v1616, %v1623
    %1625 = vrot.lane.b32.xlu0 %v1409, 96
    %v1626 = vpop.permute.xlu0 %1625
    %v1628 = vmul.f32 %v1624, %v1626
    %1629 = vrot.lane.b32.xlu0 %v1409, 80
    %v1630 = vpop.permute.xlu0 %1629
    %v1632 = vadd.f32 %v1628, %v1630
    %v1634 = vrot.slane %v1632, 1
    %1635 = vrot.lane.b32.xlu0 %v1634, 16
    %v1636 = vpop.permute.xlu0 %1635
    %v1638 = vsel %vm218, %v1632, %v1636
    %v1640 = vrot.slane %v1638, 3
    %v1642 = vrot.slane %v1638, 5
    %vm1644 = vcmask 1040384
    %v1645 = vsel %vm1644, %v1640, %v1642
    %1646 = vrot.lane.b32.xlu0 %v795, 96
    %v1647 = vpop.permute.xlu0 %1646
    %1648 = vrot.lane.b32.xlu0 %v796, 96
    %v1649 = vpop.permute.xlu0 %1648
    %1650 = vrot.lane.b32.xlu0 %v797, 96
    %v1651 = vpop.permute.xlu0 %1650
    %1652 = vrot.lane.b32.xlu0 %v798, 96
    %v1653 = vpop.permute.xlu0 %1652
    %1659 = vrot.lane.b32.xlu0 %v54, 96
    %v1660 = vpop.permute.xlu0 %1659
    %v1663 = vsel %vm802, %v1645, 0
    %1665 = vmatprep.subr.mxu0 0.0
    %1666 = vmatpush1.msra.mxu0 %v1647
    %1667 = vmatprep.subr.mxu0 0.0
    %1668 = vmatpush1.msra.mxu0 %v1649
    %1669 = vmatprep.subr.mxu0 0.0
    %1670 = vmatpush1.msra.mxu0 %v1651
    %1671 = vmatprep.subr.mxu0 0.0
    %1672 = vmatpush1.msra.mxu0 %v1653
    %1673 = vmatprep.subr.mxu0 0.0
    %1674 = vmatpush1.msra.mxu0 0.0
    %1675 = vmatprep.subr.mxu0 0.0
    %1676 = vmatpush1.msra.mxu0 0.0
    %1677 = vmatprep.subr.mxu0 0.0
    %1678 = vmatpush1.msra.mxu0 0.0
    %1679 = vmatprep.subr.mxu0 0.0
    %1680 = vmatpush1.msra.mxu0 0.0
    %1681 = vmatprep.subr.mxu0 0.0
    %1682 = vmatpush1.msra.mxu0 0.0
    %1683 = vmatprep.subr.mxu0 0.0
    %1684 = vmatpush1.msra.mxu0 0.0
    %1685 = vmatprep.subr.mxu0 0.0
    %1686 = vmatpush1.msra.mxu0 0.0
    %1687 = vmatprep.subr.mxu0 0.0
    %1688 = vmatpush1.msra.mxu0 0.0
    %1689 = vmatprep.subr.mxu0 0.0
    %1690 = vmatpush1.msra.mxu0 0.0
    %1691 = vmatprep.subr.mxu0 0.0
    %1692 = vmatpush1.msra.mxu0 0.0
    %1693 = vmatprep.subr.mxu0 0.0
    %1694 = vmatpush1.msra.mxu0 0.0
    %1695 = vmatprep.subr.mxu0 0.0
    %1696 = vmatpush1.msra.mxu0 0.0
    %1697 = vmatprep.subr.mxu0 0.0
    %1698 = vmatpush1.msra.mxu0 0.0
    %1699 = vmatprep.subr.mxu0 0.0
    %1700 = vmatpush1.msra.mxu0 0.0
    %1701 = vmatprep.subr.mxu0 0.0
    %1702 = vmatpush1.msra.mxu0 0.0
    %1703 = vmatprep.subr.mxu0 0.0
    %1704 = vmatpush1.msra.mxu0 0.0
    %1705 = vmatprep.subr.mxu0 0.0
    %1706 = vmatpush1.msra.mxu0 0.0
    %1707 = vmatprep.subr.mxu0 0.0
    %1708 = vmatpush1.msra.mxu0 0.0
    %1709 = vmatprep.subr.mxu0 0.0
    %1710 = vmatpush1.msra.mxu0 0.0
    %1711 = vmatprep.subr.mxu0 0.0
    %1712 = vmatpush1.msra.mxu0 0.0
    %1713 = vmatprep.subr.mxu0 0.0
    %1714 = vmatpush1.msra.mxu0 0.0
    %1715 = vmatprep.subr.mxu0 0.0
    %1716 = vmatpush1.msra.mxu0 0.0
    %1717 = vmatprep.subr.mxu0 0.0
    %1718 = vmatpush1.msra.mxu0 0.0
    %1719 = vmatprep.subr.mxu0 0.0
    %1720 = vmatpush1.msra.mxu0 0.0
    %1721 = vmatprep.subr.mxu0 0.0
    %1722 = vmatpush1.msra.mxu0 0.0
    %1723 = vmatprep.subr.mxu0 0.0
    %1724 = vmatpush1.msra.mxu0 0.0
    %1725 = vmatprep.subr.mxu0 0.0
    %1726 = vmatpush1.msra.mxu0 0.0
    %1727 = vmatprep.subr.mxu0 0.0
    %1728 = vmatpush1.msra.mxu0 0.0
    %1729 = vmatprep.mubr.f32.mxu0 0.0
    %1730 = vmatmul.mubr.f32.gmra.mrb[0].mxu0 %v1663
    %v1731 = vpop.f32.mrb[0].mxu0
    %v1732 = vadd.f32 %v1660, %v1731
    %v1733 = vpop.f32.mrb[0].mxu0
    %1734 = vdwg.mxu0
    %vm1735 = vcmask 58368
    %1736 = vst.msk [vmem:[%s4] sm:$0x3] %vm1735, %v1732
    // Predicated region
    $region22: #{fwd.1} parent=1 // pred_check
      _
    $region23: #{fwd.1} parent=1 // pred_check_branch
      %1738 = sbr.rel (0) target = $region25
    $region24: #{fwd.1} parent=1 // pred_region
      _
    $region25: #{fwd.1} parent=1 // pred_fallthru
      _
    // Predicated region
    $region26: #{fwd.1} parent=1 // pred_check
      _
    $region27: #{fwd.1} parent=1 // pred_check_branch
      %1740 = sbr.rel (0) target = $region29
    $region28: #{fwd.1} parent=1 // pred_region
      _
    $region29: #{fwd.1} parent=1 // pred_fallthru
      _
    %1741 = vsyncpa [#allocation3], 1

</llo_original>
